<compile_context>
chip_gen: v7x
topology: tpu7x:2x2x1
jax: 0.10.0
libtpu: 0.0.40
codegen_flags: <defaults>
</compile_context>

<pallas_src>
import functools

import jax
import jax.numpy as jnp
from jax.experimental import pallas as pl
from jax.experimental.pallas import tpu as pltpu


# ---------------------------------------------------------------------------
# Fused kernel: projections + criss-cross attention for one output stream.
# ---------------------------------------------------------------------------
def _cc_fused_kernel(xs_ref, xst_ref, xot_ref, wv_ref, bv_ref,
                     wkt_ref, bkt_ref, wqt_ref, bqt_ref,
                     mask_ref, gamma_ref, o_ref):
    # Layouts (P = B*H*W is always the last / 128-wide lane axis):
    #   xs_ref  : (C,  P)   this stream's input (value/key source + residual)
    #   xst_ref : (P,  C)   same input, transposed (key projection operand)
    #   xot_ref : (P,  C)   other stream's input, transposed (query operand)
    #   wv_ref  : (C,  C)   bv_ref : (C, 1)
    #   wkt_ref : (C, Cqp)  bkt_ref: (1, Cqp)   (wk^T, zero-padded)
    #   wqt_ref : (C, Cqp)  bqt_ref: (1, Cqp)   (wq^T of the *other* stream)
    #   mask_ref: (P,  P)   additive mask: 0 on the criss-cross pattern,
    #                       -1e30 elsewhere (diagonal counted once)
    #   gamma_ref: (1,)     scalar in SMEM
    #   o_ref   : (C,  P)
    f32 = jnp.float32
    xs = xs_ref[...]                                               # (C, P)

    # ---- fused 1x1 projections (standard-contraction MXU dots) ----------
    v = jnp.dot(wv_ref[...], xs, preferred_element_type=f32) + bv_ref[...]
    kt = jnp.dot(xst_ref[...], wkt_ref[...],
                 preferred_element_type=f32) + bkt_ref[...]        # (P, Cqp)
    qt = jnp.dot(xot_ref[...], wqt_ref[...],
                 preferred_element_type=f32) + bqt_ref[...]        # (P, Cqp)

    # ---- dense criss-cross energies: E[p', p] = sum_c k[c,p'] * q[c,p] ---
    # (q @ k^T attention-score pattern: contract trailing channel dims)
    e = jax.lax.dot_general(kt, qt, (((1,), (1,)), ((), ())),
                            preferred_element_type=f32)            # (P, P)
    e = e + mask_ref[...]

    # ---- joint (row + column) softmax over the key axis p' (axis 0) ------
    m = jnp.max(e, axis=0, keepdims=True)                          # (1, P)
    p_exp = jnp.exp(e - m)                                         # (P, P)
    denom = jnp.sum(p_exp, axis=0, keepdims=True)                  # (1, P)
    att = p_exp * (1.0 / denom)                                    # exact

    # ---- value aggregation (one MXU matmul) + gamma residual -------------
    agg = jnp.dot(v, att, preferred_element_type=f32)              # (C, P)
    o_ref[...] = (gamma_ref[0] * agg + xs).astype(o_ref.dtype)


# ---------------------------------------------------------------------------
# Module forward: exactly one pallas_call.
# ---------------------------------------------------------------------------
def criss_cross_attention_1(x0, x1, params):
    B, C, H, W = x0.shape
    Cq = params["wq0"].shape[0]
    Cqp = max(8, ((Cq + 7) // 8) * 8)          # pad tiny q/k channel dim
    P = B * H * W
    f32 = jnp.float32

    # ---- lane-dense pixel-flat layouts (layout plumbing, done once) ------
    def flat(x):      # (B,C,H,W) -> (C, P),  p = b*H*W + i*W + j
        return jnp.transpose(x, (1, 0, 2, 3)).reshape(C, P).astype(f32)

    def flat_t(x):    # (B,C,H,W) -> (P, C)
        return jnp.transpose(x, (0, 2, 3, 1)).reshape(P, C).astype(f32)

    xf = jnp.stack([flat(x0), flat(x1)])                           # (2, C, P)
    xft = jnp.stack([flat_t(x0), flat_t(x1)])                      # (2, P, C)

    def pad_t(w):     # (Cq, C) -> (C, Cqp) zero-padded transpose
        return jnp.zeros((C, Cqp), f32).at[:, :Cq].set(
            jnp.transpose(w).astype(f32))

    def pad_b(b):     # (Cq,) -> (1, Cqp)
        return jnp.zeros((1, Cqp), f32).at[0, :Cq].set(b.astype(f32))

    wv_all = jnp.stack([params["wv0"], params["wv1"]]).astype(f32)       # (2,C,C)
    bv_all = jnp.stack([params["bv0"], params["bv1"]]).astype(f32)[:, :, None]
    wkt_all = jnp.stack([pad_t(params["wk0"]), pad_t(params["wk1"])])    # (2,C,Cqp)
    bkt_all = jnp.stack([pad_b(params["bk0"]), pad_b(params["bk1"])])    # (2,1,Cqp)
    wqt_all = jnp.stack([pad_t(params["wq0"]), pad_t(params["wq1"])])
    bqt_all = jnp.stack([pad_b(params["bq0"]), pad_b(params["bq1"])])

    # ---- additive criss-cross mask (constant, resident across streams) ---
    pid = jnp.arange(P, dtype=jnp.int32)
    b_i = pid // (H * W)
    i_i = (pid // W) % H
    j_i = pid % W
    same_b = b_i[:, None] == b_i[None, :]
    same_row = same_b & (i_i[:, None] == i_i[None, :])
    same_col = same_b & (j_i[:, None] == j_i[None, :])
    diag = pid[:, None] == pid[None, :]
    valid = same_row | (same_col & ~diag)      # diagonal kept once (row branch)
    mask = jnp.where(valid, 0.0, -1e30).astype(f32)                 # (P, P)

    gamma = params["gamma"].astype(f32)

    # Stream s: values/keys/residual from x_s, queries from the *other*
    # stream's projection (exact cross-wiring of the PyTorch forward).
    out = pl.pallas_call(
        _cc_fused_kernel,
        out_shape=jax.ShapeDtypeStruct((2, C, P), f32),
        grid=(2,),
        in_specs=[
            pl.BlockSpec((None, C, P), lambda s: (s, 0, 0)),        # x_self
            pl.BlockSpec((None, P, C), lambda s: (s, 0, 0)),        # x_self^T
            pl.BlockSpec((None, P, C), lambda s: (1 - s, 0, 0)),    # x_other^T
            pl.BlockSpec((None, C, C), lambda s: (s, 0, 0)),        # wv
            pl.BlockSpec((None, C, 1), lambda s: (s, 0, 0)),        # bv
            pl.BlockSpec((None, C, Cqp), lambda s: (s, 0, 0)),      # wk^T
            pl.BlockSpec((None, 1, Cqp), lambda s: (s, 0, 0)),      # bk^T
            pl.BlockSpec((None, C, Cqp), lambda s: (1 - s, 0, 0)),  # wq^T (other)
            pl.BlockSpec((None, 1, Cqp), lambda s: (1 - s, 0, 0)),  # bq^T (other)
            pl.BlockSpec((P, P), lambda s: (0, 0)),                 # mask
            pl.BlockSpec(memory_space=pltpu.MemorySpace.SMEM),      # gamma
        ],
        out_specs=pl.BlockSpec((None, C, P), lambda s: (s, 0, 0)),
        compiler_params=pltpu.CompilerParams(
            dimension_semantics=("parallel",)),
    )(xf, xft, xft, wv_all, bv_all, wkt_all, bkt_all, wqt_all, bqt_all,
      mask, gamma)

    # NCHW un-flatten, once, in XLA.
    out = jnp.transpose(out.reshape(2, C, B, H, W), (0, 2, 1, 3, 4))
    return out[0], out[1]


# ---------------------------------------------------------------------------
# Pure-JAX reference (mirrors the PyTorch forward exactly) for validation.
# ---------------------------------------------------------------------------
def reference(x0, x1, p):
    def conv(x, w, b):
        return jnp.einsum("oc,bchw->bohw", w, x) + b[None, :, None, None]

    def cc(q, k, v, x, gamma):
        B, _, H, W = x.shape
        eh = jnp.einsum("bcij,bchj->bijh", q, k)
        eye = jnp.eye(H, dtype=bool)
        eh = jnp.where(eye[None, :, None, :], -jnp.inf, eh)
        ew = jnp.einsum("bcij,bciw->bijw", q, k)
        att = jax.nn.softmax(jnp.concatenate([eh, ew], axis=-1), axis=-1)
        ah, aw = att[..., :H], att[..., H:]
        oh = jnp.einsum("bchj,bijh->bcij", v, ah)
        ow = jnp.einsum("bciw,bijw->bcij", v, aw)
        return gamma[0] * (oh + ow) + x

    q0 = conv(x0, p["wq0"], p["bq0"]); k0 = conv(x0, p["wk0"], p["bk0"])
    v0 = conv(x0, p["wv0"], p["bv0"])
    q1 = conv(x1, p["wq1"], p["bq1"]); k1 = conv(x1, p["wk1"], p["bk1"])
    v1 = conv(x1, p["wv1"], p["bv1"])
    return cc(q1, k0, v0, x0, p["gamma"]), cc(q0, k1, v1, x1, p["gamma"])


if __name__ == "__main__":
    B, C, H, W = 2, 16, 8, 8           # in_dim = 16 -> Cq = 2; B*H*W = 128
    Cq = C // 8

    key = jax.random.PRNGKey(0)
    ks = jax.random.split(key, 16)
    f32 = jnp.float32

    params = {
        "wq0": 0.1 * jax.random.normal(ks[0], (Cq, C), f32),
        "bq0": 0.1 * jax.random.normal(ks[1], (Cq,), f32),
        "wk0": 0.1 * jax.random.normal(ks[2], (Cq, C), f32),
        "bk0": 0.1 * jax.random.normal(ks[3], (Cq,), f32),
        "wv0": 0.1 * jax.random.normal(ks[4], (C, C), f32),
        "bv0": 0.1 * jax.random.normal(ks[5], (C,), f32),
        "wq1": 0.1 * jax.random.normal(ks[6], (Cq, C), f32),
        "bq1": 0.1 * jax.random.normal(ks[7], (Cq,), f32),
        "wk1": 0.1 * jax.random.normal(ks[8], (Cq, C), f32),
        "bk1": 0.1 * jax.random.normal(ks[9], (Cq,), f32),
        "wv1": 0.1 * jax.random.normal(ks[10], (C, C), f32),
        "bv1": 0.1 * jax.random.normal(ks[11], (C,), f32),
        # nn.Parameter(torch.zeros(1)) -> gamma inits to 0; use a nonzero
        # deterministic value so the attention path is actually exercised.
        "gamma": jnp.array([0.5], f32),
    }

    x0 = jax.random.normal(ks[12], (B, C, H, W), f32)
    x1 = jax.random.normal(ks[13], (B, C, H, W), f32)

    fwd = jax.jit(functools.partial(criss_cross_attention_1, params=params))
    out0, out1 = fwd(x0, x1)
    jax.block_until_ready((out0, out1))

    ref0, ref1 = reference(x0, x1, params)
    assert out0.shape == (B, C, H, W) and out1.shape == (B, C, H, W)
    # tolerance covers default-precision f32 MXU matmuls (different
    # contraction order vs. the XLA reference); softmax reciprocal is exact.
    assert jnp.allclose(out0, ref0, rtol=5e-3, atol=5e-3), "stream 0 mismatch"
    assert jnp.allclose(out1, ref1, rtol=5e-3, atol=5e-3), "stream 1 mismatch"

    print("KERNEL_OK")
</pallas_src>

<mosaic_0001>
module attributes {stable_mosaic.version = 11 : i64} {
  func.func @_cc_fused_kernel(%arg0: i32, %arg1: memref<1x16x128xf32, #tpu.memory_space<vmem>>, %arg2: memref<1x128x16xf32, #tpu.memory_space<vmem>>, %arg3: memref<1x128x16xf32, #tpu.memory_space<vmem>>, %arg4: memref<1x16x16xf32, #tpu.memory_space<vmem>>, %arg5: memref<1x16x1xf32, #tpu.memory_space<vmem>>, %arg6: memref<1x16x8xf32, #tpu.memory_space<vmem>>, %arg7: memref<1x1x8xf32, #tpu.memory_space<vmem>>, %arg8: memref<1x16x8xf32, #tpu.memory_space<vmem>>, %arg9: memref<1x1x8xf32, #tpu.memory_space<vmem>>, %arg10: memref<128x128xf32, #tpu.memory_space<vmem>>, %arg11: memref<1xf32, #tpu.memory_space<smem>>, %arg12: memref<1x16x128xf32, #tpu.memory_space<vmem>>) attributes {dimension_semantics = [#tpu.dimension_semantics<parallel>], iteration_bounds = array<i64: 2>, scalar_prefetch = 0 : i64, scratch_operands = 0 : i64, tpu.core_type = #tpu.core_type<tc>, window_params = [{transform_indices = @transform_0, window_bounds = array<i64: 1, 16, 128>}, {transform_indices = @transform_1, window_bounds = array<i64: 1, 128, 16>}, {transform_indices = @transform_2, window_bounds = array<i64: 1, 128, 16>}, {transform_indices = @transform_3, window_bounds = array<i64: 1, 16, 16>}, {transform_indices = @transform_4, window_bounds = array<i64: 1, 16, 1>}, {transform_indices = @transform_5, window_bounds = array<i64: 1, 16, 8>}, {transform_indices = @transform_6, window_bounds = array<i64: 1, 1, 8>}, {transform_indices = @transform_7, window_bounds = array<i64: 1, 16, 8>}, {transform_indices = @transform_8, window_bounds = array<i64: 1, 1, 8>}, {pipeline_mode = #tpu.pipeline_mode<synchronous>, transform_indices = @transform_9, window_bounds = array<i64: 128, 128>}, {transform_indices = @transform_10, window_bounds = array<i64: 1>}, {transform_indices = @transform_11, window_bounds = array<i64: 1, 16, 128>}]} {
    %c0 = arith.constant 0 : index
    %c0_0 = arith.constant 0 : index
    %c0_1 = arith.constant 0 : index
    %0 = vector.load %arg1[%c0, %c0_0, %c0_1] : memref<1x16x128xf32, #tpu.memory_space<vmem>>, vector<1x16x128xf32>
    %1 = vector.shape_cast %0 : vector<1x16x128xf32> to vector<16x128xf32>
    %c0_2 = arith.constant 0 : index
    %c0_3 = arith.constant 0 : index
    %c0_4 = arith.constant 0 : index
    %2 = vector.load %arg4[%c0_2, %c0_3, %c0_4] : memref<1x16x16xf32, #tpu.memory_space<vmem>>, vector<1x16x16xf32>
    %3 = vector.shape_cast %2 : vector<1x16x16xf32> to vector<16x16xf32>
    %cst = arith.constant dense<0.000000e+00> : vector<16x128xf32>
    %4 = tpu.matmul %3, %1, %cst {dimension_numbers = #tpu.dot_dimension_numbers<[1], [0], [0], [1], [0, 0, 1, 1], [], []>} : vector<16x16xf32>, vector<16x128xf32>, vector<16x128xf32> -> vector<16x128xf32>
    %c0_5 = arith.constant 0 : index
    %c0_6 = arith.constant 0 : index
    %c0_7 = arith.constant 0 : index
    %5 = vector.load %arg5[%c0_5, %c0_6, %c0_7] : memref<1x16x1xf32, #tpu.memory_space<vmem>>, vector<1x16x1xf32>
    %6 = vector.shape_cast %5 : vector<1x16x1xf32> to vector<16x1xf32>
    %7 = vector.broadcast %6 : vector<16x1xf32> to vector<16x128xf32>
    %8 = arith.addf %4, %7 : vector<16x128xf32>
    %c0_8 = arith.constant 0 : index
    %c0_9 = arith.constant 0 : index
    %c0_10 = arith.constant 0 : index
    %9 = vector.load %arg2[%c0_8, %c0_9, %c0_10] : memref<1x128x16xf32, #tpu.memory_space<vmem>>, vector<1x128x16xf32>
    %10 = vector.shape_cast %9 : vector<1x128x16xf32> to vector<128x16xf32>
    %c0_11 = arith.constant 0 : index
    %c0_12 = arith.constant 0 : index
    %c0_13 = arith.constant 0 : index
    %11 = vector.load %arg6[%c0_11, %c0_12, %c0_13] : memref<1x16x8xf32, #tpu.memory_space<vmem>>, vector<1x16x8xf32>
    %12 = vector.shape_cast %11 : vector<1x16x8xf32> to vector<16x8xf32>
    %cst_14 = arith.constant dense<0.000000e+00> : vector<128x8xf32>
    %13 = tpu.matmul %10, %12, %cst_14 {dimension_numbers = #tpu.dot_dimension_numbers<[1], [0], [0], [1], [0, 0, 1, 1], [], []>} : vector<128x16xf32>, vector<16x8xf32>, vector<128x8xf32> -> vector<128x8xf32>
    %c0_15 = arith.constant 0 : index
    %c0_16 = arith.constant 0 : index
    %c0_17 = arith.constant 0 : index
    %14 = vector.load %arg7[%c0_15, %c0_16, %c0_17] : memref<1x1x8xf32, #tpu.memory_space<vmem>>, vector<1x1x8xf32>
    %15 = vector.shape_cast %14 : vector<1x1x8xf32> to vector<1x8xf32>
    %16 = vector.broadcast %15 : vector<1x8xf32> to vector<128x8xf32>
    %17 = arith.addf %13, %16 : vector<128x8xf32>
    %c0_18 = arith.constant 0 : index
    %c0_19 = arith.constant 0 : index
    %c0_20 = arith.constant 0 : index
    %18 = vector.load %arg3[%c0_18, %c0_19, %c0_20] : memref<1x128x16xf32, #tpu.memory_space<vmem>>, vector<1x128x16xf32>
    %19 = vector.shape_cast %18 : vector<1x128x16xf32> to vector<128x16xf32>
    %c0_21 = arith.constant 0 : index
    %c0_22 = arith.constant 0 : index
    %c0_23 = arith.constant 0 : index
    %20 = vector.load %arg8[%c0_21, %c0_22, %c0_23] : memref<1x16x8xf32, #tpu.memory_space<vmem>>, vector<1x16x8xf32>
    %21 = vector.shape_cast %20 : vector<1x16x8xf32> to vector<16x8xf32>
    %cst_24 = arith.constant dense<0.000000e+00> : vector<128x8xf32>
    %22 = tpu.matmul %19, %21, %cst_24 {dimension_numbers = #tpu.dot_dimension_numbers<[1], [0], [0], [1], [0, 0, 1, 1], [], []>} : vector<128x16xf32>, vector<16x8xf32>, vector<128x8xf32> -> vector<128x8xf32>
    %c0_25 = arith.constant 0 : index
    %c0_26 = arith.constant 0 : index
    %c0_27 = arith.constant 0 : index
    %23 = vector.load %arg9[%c0_25, %c0_26, %c0_27] : memref<1x1x8xf32, #tpu.memory_space<vmem>>, vector<1x1x8xf32>
    %24 = vector.shape_cast %23 : vector<1x1x8xf32> to vector<1x8xf32>
    %25 = vector.broadcast %24 : vector<1x8xf32> to vector<128x8xf32>
    %26 = arith.addf %22, %25 : vector<128x8xf32>
    %cst_28 = arith.constant dense<0.000000e+00> : vector<128x128xf32>
    %27 = tpu.matmul %17, %26, %cst_28 {dimension_numbers = #tpu.dot_dimension_numbers<[1], [1], [0], [0], [0, 0, 1, 0], [], []>} : vector<128x8xf32>, vector<128x8xf32>, vector<128x128xf32> -> vector<128x128xf32>
    %c0_29 = arith.constant 0 : index
    %c0_30 = arith.constant 0 : index
    %28 = vector.load %arg10[%c0_29, %c0_30] : memref<128x128xf32, #tpu.memory_space<vmem>>, vector<128x128xf32>
    %29 = arith.addf %27, %28 : vector<128x128xf32>
    %cst_31 = arith.constant dense<0xFF800000> : vector<128xf32>
    %30 = vector.multi_reduction <maximumf>, %29, %cst_31 [0] : vector<128x128xf32> to vector<128xf32>
    %31 = vector.shape_cast %30 : vector<128xf32> to vector<1x128xf32>
    %32 = vector.broadcast %31 : vector<1x128xf32> to vector<128x128xf32>
    %33 = arith.subf %29, %32 : vector<128x128xf32>
    %34 = math.exp %33 : vector<128x128xf32>
    %cst_32 = arith.constant dense<0.000000e+00> : vector<128xf32>
    %35 = vector.multi_reduction <add>, %34, %cst_32 [0] : vector<128x128xf32> to vector<128xf32>
    %36 = vector.shape_cast %35 : vector<128xf32> to vector<1x128xf32>
    %cst_33 = arith.constant 1.000000e+00 : f32
    %37 = vector.broadcast %cst_33 : f32 to vector<1x128xf32>
    %38 = arith.divf %37, %36 : vector<1x128xf32>
    %39 = vector.broadcast %38 : vector<1x128xf32> to vector<128x128xf32>
    %40 = arith.mulf %34, %39 : vector<128x128xf32>
    %cst_34 = arith.constant dense<0.000000e+00> : vector<16x128xf32>
    %41 = tpu.matmul %8, %40, %cst_34 {dimension_numbers = #tpu.dot_dimension_numbers<[1], [0], [0], [1], [0, 0, 1, 1], [], []>} : vector<16x128xf32>, vector<128x128xf32>, vector<16x128xf32> -> vector<16x128xf32>
    %c0_35 = arith.constant 0 : index
    %42 = memref.load %arg11[%c0_35] : memref<1xf32, #tpu.memory_space<smem>>
    %43 = vector.broadcast %42 : f32 to vector<16x128xf32>
    %44 = arith.mulf %43, %41 : vector<16x128xf32>
    %45 = arith.addf %44, %1 : vector<16x128xf32>
    %c0_36 = arith.constant 0 : index
    %c0_37 = arith.constant 0 : index
    %c0_38 = arith.constant 0 : index
    %46 = vector.load %arg12[%c0_36, %c0_37, %c0_38] : memref<1x16x128xf32, #tpu.memory_space<vmem>>, vector<1x16x128xf32>
    %47 = vector.shape_cast %46 : vector<1x16x128xf32> to vector<16x128xf32>
    %48 = vector.shape_cast %45 : vector<16x128xf32> to vector<1x16x128xf32>
    tpu.vector_store %arg12[%c0_36, %c0_37, %c0_38], %48 {strides = array<i32>} : memref<1x16x128xf32, #tpu.memory_space<vmem>>, vector<1x16x128xf32>,
    return
  }
  func.func @transform_0(%arg0: i32) -> (i32, i32, i32) {
    %c0_i32 = arith.constant 0 : i32
    %c0_i32_0 = arith.constant 0 : i32
    %c0_i32_1 = arith.constant 0 : i32
    return %arg0, %c0_i32, %c0_i32_0 : i32, i32, i32
  }
  func.func @transform_1(%arg0: i32) -> (i32, i32, i32) {
    %c0_i32 = arith.constant 0 : i32
    %c0_i32_0 = arith.constant 0 : i32
    %c0_i32_1 = arith.constant 0 : i32
    return %arg0, %c0_i32, %c0_i32_0 : i32, i32, i32
  }
  func.func @transform_2(%arg0: i32) -> (i32, i32, i32) {
    %c1_i32 = arith.constant 1 : i32
    %0 = arith.subi %c1_i32, %arg0 : i32
    %c0_i32 = arith.constant 0 : i32
    %c0_i32_0 = arith.constant 0 : i32
    %c0_i32_1 = arith.constant 0 : i32
    return %0, %c0_i32, %c0_i32_0 : i32, i32, i32
  }
  func.func @transform_3(%arg0: i32) -> (i32, i32, i32) {
    %c0_i32 = arith.constant 0 : i32
    %c0_i32_0 = arith.constant 0 : i32
    %c0_i32_1 = arith.constant 0 : i32
    return %arg0, %c0_i32, %c0_i32_0 : i32, i32, i32
  }
  func.func @transform_4(%arg0: i32) -> (i32, i32, i32) {
    %c0_i32 = arith.constant 0 : i32
    %c0_i32_0 = arith.constant 0 : i32
    %c0_i32_1 = arith.constant 0 : i32
    return %arg0, %c0_i32, %c0_i32_0 : i32, i32, i32
  }
  func.func @transform_5(%arg0: i32) -> (i32, i32, i32) {
    %c0_i32 = arith.constant 0 : i32
    %c0_i32_0 = arith.constant 0 : i32
    %c0_i32_1 = arith.constant 0 : i32
    return %arg0, %c0_i32, %c0_i32_0 : i32, i32, i32
  }
  func.func @transform_6(%arg0: i32) -> (i32, i32, i32) {
    %c0_i32 = arith.constant 0 : i32
    %c0_i32_0 = arith.constant 0 : i32
    %c0_i32_1 = arith.constant 0 : i32
    return %arg0, %c0_i32, %c0_i32_0 : i32, i32, i32
  }
  func.func @transform_7(%arg0: i32) -> (i32, i32, i32) {
    %c1_i32 = arith.constant 1 : i32
    %0 = arith.subi %c1_i32, %arg0 : i32
    %c0_i32 = arith.constant 0 : i32
    %c0_i32_0 = arith.constant 0 : i32
    %c0_i32_1 = arith.constant 0 : i32
    return %0, %c0_i32, %c0_i32_0 : i32, i32, i32
  }
  func.func @transform_8(%arg0: i32) -> (i32, i32, i32) {
    %c1_i32 = arith.constant 1 : i32
    %0 = arith.subi %c1_i32, %arg0 : i32
    %c0_i32 = arith.constant 0 : i32
    %c0_i32_0 = arith.constant 0 : i32
    %c0_i32_1 = arith.constant 0 : i32
    return %0, %c0_i32, %c0_i32_0 : i32, i32, i32
  }
  func.func @transform_9(%arg0: i32) -> (i32, i32) {
    %c0_i32 = arith.constant 0 : i32
    %c0_i32_0 = arith.constant 0 : i32
    %c0_i32_1 = arith.constant 0 : i32
    return %c0_i32, %c0_i32_0 : i32, i32
  }
  func.func @transform_10(%arg0: i32) -> i32 {
    %c0_i32 = arith.constant 0 : i32
    %c0_i32_0 = arith.constant 0 : i32
    return %c0_i32 : i32
  }
  func.func @transform_11(%arg0: i32) -> (i32, i32, i32) {
    %c0_i32 = arith.constant 0 : i32
    %c0_i32_0 = arith.constant 0 : i32
    %c0_i32_1 = arith.constant 0 : i32
    return %arg0, %c0_i32, %c0_i32_0 : i32, i32, i32
  }
}

</mosaic_0001>

<llo_original>
// kernel: criss_cross_attention_1.1
$region0: #{criss_cross_attention_1.1}
  #allocation0 [shape = 'u32[]', space=smem, size = 0x4, offset = 0x4, fixed_abs, tag = 'smem constant byte address 0x4 - core index']
  #allocation1 [shape = 'u32[144,128]{1,0:T(1,128)}', space=vmem, size = 0x12000, scoped, tag = 'internal scratch']
  #allocation2 [shape = 'f32[1]{0:T(128)S(6)}', space=smem, size = 0x200, scoped, tag = 'scoped memory for criss_cross_attention_1.1']
  %s0 = inlined_call_operand.vmem [shape: f32[2,16,128], index: 0, kind: input, shape index: {}]
  %s1 = inlined_call_operand.vmem [shape: f32[2,128,16], index: 1, kind: input, shape index: {}, may-alias: {1,2}]
  %s2 = inlined_call_operand.vmem [shape: f32[2,128,16], index: 2, kind: input, shape index: {}, may-alias: {1,2}]
  %s3 = inlined_call_operand.vmem [shape: f32[2,16,16], index: 3, kind: input, shape index: {}]
  %s4 = inlined_call_operand.vmem [shape: f32[2,16,1], index: 4, kind: input, shape index: {}]
  %s5 = inlined_call_operand.vmem [shape: f32[2,16,8], index: 5, kind: input, shape index: {}]
  %s6 = inlined_call_operand.vmem [shape: f32[2,1,8], index: 6, kind: input, shape index: {}]
  %s7 = inlined_call_operand.vmem [shape: f32[2,16,8], index: 7, kind: input, shape index: {}]
  %s8 = inlined_call_operand.vmem [shape: f32[2,1,8], index: 8, kind: input, shape index: {}]
  %s9 = inlined_call_operand.vmem [shape: f32[128,128], index: 9, kind: input, shape index: {}]
  %s10 = inlined_call_operand.<no memory space> [shape: f32[1], index: 10, kind: input, shape index: {}]
  %s11 = inlined_call_operand.vmem [shape: f32[2,16,128], index: 11, kind: output, shape index: {}]
  %s12 = sld [smem:[#allocation0]]
  $region77: #{criss_cross_attention_1.1} parent=0
    _
  %s14 = ssub.s32 1, %s12
  %s15 = scalar_select 0, %s14, %s12
  %16 = sst [smem:[#allocation2]] %s10
  loop: start=0, step=1, limit=4
  $region2: #{criss_cross_attention_1.1} parent=0 // loop_pre_header
    _
  $region3: #{criss_cross_attention_1.1} parent=0 // loop_header
    %s18 = sphi 0, %s22
    %p19 = scmp.ge.s32.totalorder %s18, 4
    %s28 = sphi 0, %s30
    %s31 = sphi 0, %s28
    %s32 = sphi 0, %s31
    %s48 = sphi 0, %s32
    %s54 = sphi 0, %s56
    %s57 = sphi 0, %s54
    %s58 = sphi 0, %s57
    %s74 = sphi 0, %s58
    %s82 = sphi 0, %s84
    %s85 = sphi 0, %s82
    %s86 = sphi 0, %s85
    %s102 = sphi 0, %s86
    %s108 = sphi 0, %s110
    %s111 = sphi 0, %s108
    %s112 = sphi 0, %s111
    %s128 = sphi 0, %s112
    %s134 = sphi 0, %s136
    %s137 = sphi 0, %s134
    %s138 = sphi 0, %s137
    %s154 = sphi 0, %s138
    %s160 = sphi 0, %s162
    %s163 = sphi 0, %s160
    %s164 = sphi 0, %s163
    %s180 = sphi 0, %s164
    %s186 = sphi 0, %s188
    %s189 = sphi 0, %s186
    %s190 = sphi 0, %s189
    %s206 = sphi 0, %s190
    %s214 = sphi 0, %s216
    %s217 = sphi 0, %s214
    %s218 = sphi 0, %s217
    %s234 = sphi 0, %s218
    %s242 = sphi 0, %s244
    %s245 = sphi 0, %s242
    %s246 = sphi 0, %s245
    %s262 = sphi 0, %s246
    %s266 = sphi 0, %s266
    %s268 = sphi 0, %s266
    %s269 = sphi 0, %s268
    %s283 = sphi 0, %s269
    %s287 = sphi 0, %s287
    %s289 = sphi 0, %s287
    %s290 = sphi 0, %s289
    %s304 = sphi 0, %s290
    %s310 = sphi 0, %s312
    %s313 = sphi 0, %s310
    %s314 = sphi 0, %s313
    %s330 = sphi 0, %s314
  $region4: #{criss_cross_attention_1.1} parent=0 // loop_header_branch
    %21 = sbr.rel (%p19) target = $region8
  $region5: #{criss_cross_attention_1.1} parent=0 // loop_body
    %s23 = ssub.s32 %s18, 1
    %s24 = ssub.s32 %s18, 2
    %s25 = sadd.s32 %s18, 1
    %s26 = ssub.s32 %s18, %s25
    %p27 = scmp.eq.s32.totalorder %s26, 0
    %s29 = sadd.s32 %s28, 1
    %s30 = scalar_select %p27, %s28, %s29
    %p33 = pneg %p27
    %p34 = scmp.eq.s32.totalorder %s18, 1
    %p35 = por %p33, %p34
    %p36 = scmp.ne.s32.totalorder %s28, %s31
    %p37 = scmp.eq.s32.totalorder %s18, 0
    %p38 = por %p36, %p37
    %p39 = scmp.ne.s32.totalorder %s28, %s31
    %p40 = scmp.eq.s32.totalorder %s23, 1
    %p41 = por %p39, %p40
    %p42 = scmp.ne.s32.totalorder %s31, %s32
    %p43 = scmp.eq.s32.totalorder %s23, 0
    %p44 = por %p42, %p43
    %p45 = scmp.ne.s32.totalorder %s31, %s32
    %p46 = scmp.eq.s32.totalorder %s24, 1
    %p47 = por %p45, %p46
    %p49 = scmp.ne.s32.totalorder %s32, %s48
    %p50 = scmp.eq.s32.totalorder %s24, 0
    %p51 = por %p49, %p50
    %s52 = ssub.s32 %s18, %s25
    %p53 = scmp.eq.s32.totalorder %s52, 0
    %s55 = sadd.s32 %s54, 1
    %s56 = scalar_select %p53, %s54, %s55
    %p59 = pneg %p53
    %p60 = scmp.eq.s32.totalorder %s18, 1
    %p61 = por %p59, %p60
    %p62 = scmp.ne.s32.totalorder %s54, %s57
    %p63 = scmp.eq.s32.totalorder %s18, 0
    %p64 = por %p62, %p63
    %p65 = scmp.ne.s32.totalorder %s54, %s57
    %p66 = scmp.eq.s32.totalorder %s23, 1
    %p67 = por %p65, %p66
    %p68 = scmp.ne.s32.totalorder %s57, %s58
    %p69 = scmp.eq.s32.totalorder %s23, 0
    %p70 = por %p68, %p69
    %p71 = scmp.ne.s32.totalorder %s57, %s58
    %p72 = scmp.eq.s32.totalorder %s24, 1
    %p73 = por %p71, %p72
    %p75 = scmp.ne.s32.totalorder %s58, %s74
    %p76 = scmp.eq.s32.totalorder %s24, 0
    %p77 = por %p75, %p76
    %s78 = ssub.s32 1, %s18
    %s79 = ssub.s32 1, %s25
    %s80 = ssub.s32 %s78, %s79
    %p81 = scmp.eq.s32.totalorder %s80, 0
    %s83 = sadd.s32 %s82, 1
    %s84 = scalar_select %p81, %s82, %s83
    %p87 = pneg %p81
    %p88 = scmp.eq.s32.totalorder %s18, 1
    %p89 = por %p87, %p88
    %p90 = scmp.ne.s32.totalorder %s82, %s85
    %p91 = scmp.eq.s32.totalorder %s18, 0
    %p92 = por %p90, %p91
    %p93 = scmp.ne.s32.totalorder %s82, %s85
    %p94 = scmp.eq.s32.totalorder %s23, 1
    %p95 = por %p93, %p94
    %p96 = scmp.ne.s32.totalorder %s85, %s86
    %p97 = scmp.eq.s32.totalorder %s23, 0
    %p98 = por %p96, %p97
    %p99 = scmp.ne.s32.totalorder %s85, %s86
    %p100 = scmp.eq.s32.totalorder %s24, 1
    %p101 = por %p99, %p100
    %p103 = scmp.ne.s32.totalorder %s86, %s102
    %p104 = scmp.eq.s32.totalorder %s24, 0
    %p105 = por %p103, %p104
    %s106 = ssub.s32 %s18, %s25
    %p107 = scmp.eq.s32.totalorder %s106, 0
    %s109 = sadd.s32 %s108, 1
    %s110 = scalar_select %p107, %s108, %s109
    %p113 = pneg %p107
    %p114 = scmp.eq.s32.totalorder %s18, 1
    %p115 = por %p113, %p114
    %p116 = scmp.ne.s32.totalorder %s108, %s111
    %p117 = scmp.eq.s32.totalorder %s18, 0
    %p118 = por %p116, %p117
    %p119 = scmp.ne.s32.totalorder %s108, %s111
    %p120 = scmp.eq.s32.totalorder %s23, 1
    %p121 = por %p119, %p120
    %p122 = scmp.ne.s32.totalorder %s111, %s112
    %p123 = scmp.eq.s32.totalorder %s23, 0
    %p124 = por %p122, %p123
    %p125 = scmp.ne.s32.totalorder %s111, %s112
    %p126 = scmp.eq.s32.totalorder %s24, 1
    %p127 = por %p125, %p126
    %p129 = scmp.ne.s32.totalorder %s112, %s128
    %p130 = scmp.eq.s32.totalorder %s24, 0
    %p131 = por %p129, %p130
    %s132 = ssub.s32 %s18, %s25
    %p133 = scmp.eq.s32.totalorder %s132, 0
    %s135 = sadd.s32 %s134, 1
    %s136 = scalar_select %p133, %s134, %s135
    %p139 = pneg %p133
    %p140 = scmp.eq.s32.totalorder %s18, 1
    %p141 = por %p139, %p140
    %p142 = scmp.ne.s32.totalorder %s134, %s137
    %p143 = scmp.eq.s32.totalorder %s18, 0
    %p144 = por %p142, %p143
    %p145 = scmp.ne.s32.totalorder %s134, %s137
    %p146 = scmp.eq.s32.totalorder %s23, 1
    %p147 = por %p145, %p146
    %p148 = scmp.ne.s32.totalorder %s137, %s138
    %p149 = scmp.eq.s32.totalorder %s23, 0
    %p150 = por %p148, %p149
    %p151 = scmp.ne.s32.totalorder %s137, %s138
    %p152 = scmp.eq.s32.totalorder %s24, 1
    %p153 = por %p151, %p152
    %p155 = scmp.ne.s32.totalorder %s138, %s154
    %p156 = scmp.eq.s32.totalorder %s24, 0
    %p157 = por %p155, %p156
    %s158 = ssub.s32 %s18, %s25
    %p159 = scmp.eq.s32.totalorder %s158, 0
    %s161 = sadd.s32 %s160, 1
    %s162 = scalar_select %p159, %s160, %s161
    %p165 = pneg %p159
    %p166 = scmp.eq.s32.totalorder %s18, 1
    %p167 = por %p165, %p166
    %p168 = scmp.ne.s32.totalorder %s160, %s163
    %p169 = scmp.eq.s32.totalorder %s18, 0
    %p170 = por %p168, %p169
    %p171 = scmp.ne.s32.totalorder %s160, %s163
    %p172 = scmp.eq.s32.totalorder %s23, 1
    %p173 = por %p171, %p172
    %p174 = scmp.ne.s32.totalorder %s163, %s164
    %p175 = scmp.eq.s32.totalorder %s23, 0
    %p176 = por %p174, %p175
    %p177 = scmp.ne.s32.totalorder %s163, %s164
    %p178 = scmp.eq.s32.totalorder %s24, 1
    %p179 = por %p177, %p178
    %p181 = scmp.ne.s32.totalorder %s164, %s180
    %p182 = scmp.eq.s32.totalorder %s24, 0
    %p183 = por %p181, %p182
    %s184 = ssub.s32 %s18, %s25
    %p185 = scmp.eq.s32.totalorder %s184, 0
    %s187 = sadd.s32 %s186, 1
    %s188 = scalar_select %p185, %s186, %s187
    %p191 = pneg %p185
    %p192 = scmp.eq.s32.totalorder %s18, 1
    %p193 = por %p191, %p192
    %p194 = scmp.ne.s32.totalorder %s186, %s189
    %p195 = scmp.eq.s32.totalorder %s18, 0
    %p196 = por %p194, %p195
    %p197 = scmp.ne.s32.totalorder %s186, %s189
    %p198 = scmp.eq.s32.totalorder %s23, 1
    %p199 = por %p197, %p198
    %p200 = scmp.ne.s32.totalorder %s189, %s190
    %p201 = scmp.eq.s32.totalorder %s23, 0
    %p202 = por %p200, %p201
    %p203 = scmp.ne.s32.totalorder %s189, %s190
    %p204 = scmp.eq.s32.totalorder %s24, 1
    %p205 = por %p203, %p204
    %p207 = scmp.ne.s32.totalorder %s190, %s206
    %p208 = scmp.eq.s32.totalorder %s24, 0
    %p209 = por %p207, %p208
    %s210 = ssub.s32 1, %s18
    %s211 = ssub.s32 1, %s25
    %s212 = ssub.s32 %s210, %s211
    %p213 = scmp.eq.s32.totalorder %s212, 0
    %s215 = sadd.s32 %s214, 1
    %s216 = scalar_select %p213, %s214, %s215
    %p219 = pneg %p213
    %p220 = scmp.eq.s32.totalorder %s18, 1
    %p221 = por %p219, %p220
    %p222 = scmp.ne.s32.totalorder %s214, %s217
    %p223 = scmp.eq.s32.totalorder %s18, 0
    %p224 = por %p222, %p223
    %p225 = scmp.ne.s32.totalorder %s214, %s217
    %p226 = scmp.eq.s32.totalorder %s23, 1
    %p227 = por %p225, %p226
    %p228 = scmp.ne.s32.totalorder %s217, %s218
    %p229 = scmp.eq.s32.totalorder %s23, 0
    %p230 = por %p228, %p229
    %p231 = scmp.ne.s32.totalorder %s217, %s218
    %p232 = scmp.eq.s32.totalorder %s24, 1
    %p233 = por %p231, %p232
    %p235 = scmp.ne.s32.totalorder %s218, %s234
    %p236 = scmp.eq.s32.totalorder %s24, 0
    %p237 = por %p235, %p236
    %s238 = ssub.s32 1, %s18
    %s239 = ssub.s32 1, %s25
    %s240 = ssub.s32 %s238, %s239
    %p241 = scmp.eq.s32.totalorder %s240, 0
    %s243 = sadd.s32 %s242, 1
    %s244 = scalar_select %p241, %s242, %s243
    %p247 = pneg %p241
    %p248 = scmp.eq.s32.totalorder %s18, 1
    %p249 = por %p247, %p248
    %p250 = scmp.ne.s32.totalorder %s242, %s245
    %p251 = scmp.eq.s32.totalorder %s18, 0
    %p252 = por %p250, %p251
    %p253 = scmp.ne.s32.totalorder %s242, %s245
    %p254 = scmp.eq.s32.totalorder %s23, 1
    %p255 = por %p253, %p254
    %p256 = scmp.ne.s32.totalorder %s245, %s246
    %p257 = scmp.eq.s32.totalorder %s23, 0
    %p258 = por %p256, %p257
    %p259 = scmp.ne.s32.totalorder %s245, %s246
    %p260 = scmp.eq.s32.totalorder %s24, 1
    %p261 = por %p259, %p260
    %p263 = scmp.ne.s32.totalorder %s246, %s262
    %p264 = scmp.eq.s32.totalorder %s24, 0
    %p265 = por %p263, %p264
    %s267 = sadd.s32 %s266, 1
    %p270 = scmp.eq.s32.totalorder %s18, 1
    %p271 = scmp.ne.s32.totalorder %s266, %s268
    %p272 = scmp.eq.s32.totalorder %s18, 0
    %p273 = por %p271, %p272
    %p274 = scmp.ne.s32.totalorder %s266, %s268
    %p275 = scmp.eq.s32.totalorder %s23, 1
    %p276 = por %p274, %p275
    %p277 = scmp.ne.s32.totalorder %s268, %s269
    %p278 = scmp.eq.s32.totalorder %s23, 0
    %p279 = por %p277, %p278
    %p280 = scmp.ne.s32.totalorder %s268, %s269
    %p281 = scmp.eq.s32.totalorder %s24, 1
    %p282 = por %p280, %p281
    %p284 = scmp.ne.s32.totalorder %s269, %s283
    %p285 = scmp.eq.s32.totalorder %s24, 0
    %p286 = por %p284, %p285
    %s288 = sadd.s32 %s287, 1
    %p291 = scmp.eq.s32.totalorder %s18, 1
    %p292 = scmp.ne.s32.totalorder %s287, %s289
    %p293 = scmp.eq.s32.totalorder %s18, 0
    %p294 = por %p292, %p293
    %p295 = scmp.ne.s32.totalorder %s287, %s289
    %p296 = scmp.eq.s32.totalorder %s23, 1
    %p297 = por %p295, %p296
    %p298 = scmp.ne.s32.totalorder %s289, %s290
    %p299 = scmp.eq.s32.totalorder %s23, 0
    %p300 = por %p298, %p299
    %p301 = scmp.ne.s32.totalorder %s289, %s290
    %p302 = scmp.eq.s32.totalorder %s24, 1
    %p303 = por %p301, %p302
    %p305 = scmp.ne.s32.totalorder %s290, %s304
    %p306 = scmp.eq.s32.totalorder %s24, 0
    %p307 = por %p305, %p306
    %s308 = ssub.s32 %s18, %s25
    %p309 = scmp.eq.s32.totalorder %s308, 0
    %s311 = sadd.s32 %s310, 1
    %s312 = scalar_select %p309, %s310, %s311
    %p315 = pneg %p309
    %p316 = scmp.eq.s32.totalorder %s18, 1
    %p317 = por %p315, %p316
    %p318 = scmp.ne.s32.totalorder %s310, %s313
    %p319 = scmp.eq.s32.totalorder %s18, 0
    %p320 = por %p318, %p319
    %p321 = scmp.ne.s32.totalorder %s310, %s313
    %p322 = scmp.eq.s32.totalorder %s23, 1
    %p323 = por %p321, %p322
    %p324 = scmp.ne.s32.totalorder %s313, %s314
    %p325 = scmp.eq.s32.totalorder %s23, 0
    %p326 = por %p324, %p325
    %p327 = scmp.ne.s32.totalorder %s313, %s314
    %p328 = scmp.eq.s32.totalorder %s24, 1
    %p329 = por %p327, %p328
    %p331 = scmp.ne.s32.totalorder %s314, %s330
    %p332 = scmp.eq.s32.totalorder %s24, 0
    %p333 = por %p331, %p332
    %p334 = scmp.le.s32.totalorder 1, %s18
    %p335 = scmp.lt.s32.totalorder %s18, 3
    %p336 = pnand %p334, %p335
    %p337 = pneg %p336
    // Predicated region
    $region9: #{criss_cross_attention_1.1} parent=5 // pred_check
      _
    $region10: #{criss_cross_attention_1.1} parent=5 // pred_check_branch
      %339 = sbr.rel (%p336) target = $region12
    $region11: #{criss_cross_attention_1.1} parent=5 // pred_region
      %s340 = ssub.s32 %s18, 1
      // Predicated region
      $region13: #{criss_cross_attention_1.1} parent=11 // pred_check
        %p341 = pneg %p279
      $region14: #{criss_cross_attention_1.1} parent=11 // pred_check_branch
        %343 = sbr.rel (%p341) target = $region16
      $region15: #{criss_cross_attention_1.1} parent=11 // pred_region
        _
      $region16: #{criss_cross_attention_1.1} parent=11 // pred_fallthru
        _
      // Predicated region
      $region17: #{criss_cross_attention_1.1} parent=11 // pred_check
        %p344 = pneg %p300
      $region18: #{criss_cross_attention_1.1} parent=11 // pred_check_branch
        %346 = sbr.rel (%p344) target = $region20
      $region19: #{criss_cross_attention_1.1} parent=11 // pred_region
        _
      $region20: #{criss_cross_attention_1.1} parent=11 // pred_fallthru
        _
    $region12: #{criss_cross_attention_1.1} parent=5 // pred_fallthru
      _
    %p347 = scmp.lt.s32.totalorder %s18, 2
    // Predicated region
    $region21: #{criss_cross_attention_1.1} parent=5 // pred_check
      %p348 = pneg %p347
    $region22: #{criss_cross_attention_1.1} parent=5 // pred_check_branch
      %350 = sbr.rel (%p348) target = $region24
    $region23: #{criss_cross_attention_1.1} parent=5 // pred_region
      // Predicated region
      $region25: #{criss_cross_attention_1.1} parent=23 // pred_check
        %p351 = pneg %p38
      $region26: #{criss_cross_attention_1.1} parent=23 // pred_check_branch
        %353 = sbr.rel (%p351) target = $region28
      $region27: #{criss_cross_attention_1.1} parent=23 // pred_region
        %p354 = scmp.lt.s32.totalorder %s18, 1
        %s355 = scalar_select %p354, %s18, 1
        %s356 = smul.addr %s355, 2
        %s357 = smul.addr %s356, 8
        %s358 = scalar_lea.vmem %s0, %s357
      $region28: #{criss_cross_attention_1.1} parent=23 // pred_fallthru
        _
      // Predicated region
      $region29: #{criss_cross_attention_1.1} parent=23 // pred_check
        %p359 = pneg %p64
      $region30: #{criss_cross_attention_1.1} parent=23 // pred_check_branch
        %361 = sbr.rel (%p359) target = $region32
      $region31: #{criss_cross_attention_1.1} parent=23 // pred_region
        %p362 = scmp.lt.s32.totalorder %s18, 1
        %s363 = scalar_select %p362, %s18, 1
        %s364 = smul.addr %s363, 16
        %s365 = smul.addr %s364, 8
        %s366 = scalar_lea.vmem %s1, %s365
      $region32: #{criss_cross_attention_1.1} parent=23 // pred_fallthru
        _
      // Predicated region
      $region33: #{criss_cross_attention_1.1} parent=23 // pred_check
        %p367 = pneg %p92
      $region34: #{criss_cross_attention_1.1} parent=23 // pred_check_branch
        %369 = sbr.rel (%p367) target = $region36
      $region35: #{criss_cross_attention_1.1} parent=23 // pred_region
        %s370 = ssub.s32 1, %s18
        %p371 = scmp.lt.s32.totalorder %s370, 1
        %s372 = scalar_select %p371, %s370, 1
        %s373 = smul.addr %s372, 16
        %s374 = smul.addr %s373, 8
        %s375 = scalar_lea.vmem %s2, %s374
        %s376 = ssub.s32 1, %s18
      $region36: #{criss_cross_attention_1.1} parent=23 // pred_fallthru
        _
      // Predicated region
      $region37: #{criss_cross_attention_1.1} parent=23 // pred_check
        %p377 = pneg %p118
      $region38: #{criss_cross_attention_1.1} parent=23 // pred_check_branch
        %379 = sbr.rel (%p377) target = $region40
      $region39: #{criss_cross_attention_1.1} parent=23 // pred_region
        %p380 = scmp.lt.s32.totalorder %s18, 1
        %s381 = scalar_select %p380, %s18, 1
        %s382 = smul.addr %s381, 2
        %s383 = smul.addr %s382, 8
        %s384 = scalar_lea.vmem %s3, %s383
      $region40: #{criss_cross_attention_1.1} parent=23 // pred_fallthru
        _
      // Predicated region
      $region41: #{criss_cross_attention_1.1} parent=23 // pred_check
        %p385 = pneg %p144
      $region42: #{criss_cross_attention_1.1} parent=23 // pred_check_branch
        %387 = sbr.rel (%p385) target = $region44
      $region43: #{criss_cross_attention_1.1} parent=23 // pred_region
        %p388 = scmp.lt.s32.totalorder %s18, 1
        %s389 = scalar_select %p388, %s18, 1
        %s390 = smul.addr %s389, 2
        %s391 = smul.addr %s390, 8
        %s392 = scalar_lea.vmem %s4, %s391
      $region44: #{criss_cross_attention_1.1} parent=23 // pred_fallthru
        _
      // Predicated region
      $region45: #{criss_cross_attention_1.1} parent=23 // pred_check
        %p393 = pneg %p170
      $region46: #{criss_cross_attention_1.1} parent=23 // pred_check_branch
        %395 = sbr.rel (%p393) target = $region48
      $region47: #{criss_cross_attention_1.1} parent=23 // pred_region
        %p396 = scmp.lt.s32.totalorder %s18, 1
        %s397 = scalar_select %p396, %s18, 1
        %s398 = smul.addr %s397, 2
        %s399 = smul.addr %s398, 8
        %s400 = scalar_lea.vmem %s5, %s399
      $region48: #{criss_cross_attention_1.1} parent=23 // pred_fallthru
        _
      // Predicated region
      $region49: #{criss_cross_attention_1.1} parent=23 // pred_check
        %p401 = pneg %p196
      $region50: #{criss_cross_attention_1.1} parent=23 // pred_check_branch
        %403 = sbr.rel (%p401) target = $region52
      $region51: #{criss_cross_attention_1.1} parent=23 // pred_region
        %p404 = scmp.lt.s32.totalorder %s18, 1
        %s405 = scalar_select %p404, %s18, 1
        %s406 = scalar_lea.vmem %s6, %s405
      $region52: #{criss_cross_attention_1.1} parent=23 // pred_fallthru
        _
      // Predicated region
      $region53: #{criss_cross_attention_1.1} parent=23 // pred_check
        %p407 = pneg %p224
      $region54: #{criss_cross_attention_1.1} parent=23 // pred_check_branch
        %409 = sbr.rel (%p407) target = $region56
      $region55: #{criss_cross_attention_1.1} parent=23 // pred_region
        %s410 = ssub.s32 1, %s18
        %p411 = scmp.lt.s32.totalorder %s410, 1
        %s412 = scalar_select %p411, %s410, 1
        %s413 = smul.addr %s412, 2
        %s414 = smul.addr %s413, 8
        %s415 = scalar_lea.vmem %s7, %s414
        %s416 = ssub.s32 1, %s18
      $region56: #{criss_cross_attention_1.1} parent=23 // pred_fallthru
        _
      // Predicated region
      $region57: #{criss_cross_attention_1.1} parent=23 // pred_check
        %p417 = pneg %p252
      $region58: #{criss_cross_attention_1.1} parent=23 // pred_check_branch
        %419 = sbr.rel (%p417) target = $region60
      $region59: #{criss_cross_attention_1.1} parent=23 // pred_region
        %s420 = ssub.s32 1, %s18
        %p421 = scmp.lt.s32.totalorder %s420, 1
        %s422 = scalar_select %p421, %s420, 1
        %s423 = scalar_lea.vmem %s8, %s422
        %s424 = ssub.s32 1, %s18
      $region60: #{criss_cross_attention_1.1} parent=23 // pred_fallthru
        _
    $region24: #{criss_cross_attention_1.1} parent=5 // pred_fallthru
      _
    %p425 = scmp.le.s32.totalorder 1, %s18
    %p426 = scmp.lt.s32.totalorder %s18, 3
    %p427 = pnand %p425, %p426
    %p428 = pneg %p427
    // Predicated region
    $region61: #{criss_cross_attention_1.1} parent=5 // pred_check
      _
    $region62: #{criss_cross_attention_1.1} parent=5 // pred_check_branch
      %430 = sbr.rel (%p427) target = $region64
    $region63: #{criss_cross_attention_1.1} parent=5 // pred_region
      %s431 = ssub.s32 %s18, 1
      %p432 = scmp.lt.s32.totalorder %s23, 1
      %s433 = scalar_select %p432, %s23, 1
      %s434 = smul.addr %s433, 2
      %s435 = smul.addr %s434, 8
      %s436 = scalar_lea.vmem %s0, %s435
      %p437 = pneg %p44
      %p438 = pneg %p41
      %p439 = scmp.lt.s32.totalorder %s23, 1
      %s440 = scalar_select %p439, %s23, 1
      %s441 = smul.addr %s440, 16
      %s442 = smul.addr %s441, 8
      %s443 = scalar_lea.vmem %s1, %s442
      %p444 = pneg %p70
      %p445 = pneg %p67
      %s446 = ssub.s32 1, %s23
      %p447 = scmp.lt.s32.totalorder %s446, 1
      %s448 = scalar_select %p447, %s446, 1
      %s449 = smul.addr %s448, 16
      %s450 = smul.addr %s449, 8
      %s451 = scalar_lea.vmem %s2, %s450
      %p452 = pneg %p98
      %p453 = pneg %p95
      %p454 = scmp.lt.s32.totalorder %s23, 1
      %s455 = scalar_select %p454, %s23, 1
      %s456 = smul.addr %s455, 2
      %s457 = smul.addr %s456, 8
      %s458 = scalar_lea.vmem %s3, %s457
      %p459 = pneg %p124
      %p460 = pneg %p121
      %p461 = scmp.lt.s32.totalorder %s23, 1
      %s462 = scalar_select %p461, %s23, 1
      %s463 = smul.addr %s462, 2
      %s464 = smul.addr %s463, 8
      %s465 = scalar_lea.vmem %s4, %s464
      %p466 = pneg %p150
      %p467 = pneg %p147
      %p468 = scmp.lt.s32.totalorder %s23, 1
      %s469 = scalar_select %p468, %s23, 1
      %s470 = smul.addr %s469, 2
      %s471 = smul.addr %s470, 8
      %s472 = scalar_lea.vmem %s5, %s471
      %p473 = pneg %p176
      %p474 = pneg %p173
      %p475 = scmp.lt.s32.totalorder %s23, 1
      %s476 = scalar_select %p475, %s23, 1
      %s477 = scalar_lea.vmem %s6, %s476
      %p478 = pneg %p202
      %p479 = pneg %p199
      %s480 = ssub.s32 1, %s23
      %p481 = scmp.lt.s32.totalorder %s480, 1
      %s482 = scalar_select %p481, %s480, 1
      %s483 = smul.addr %s482, 2
      %s484 = smul.addr %s483, 8
      %s485 = scalar_lea.vmem %s7, %s484
      %p486 = pneg %p230
      %p487 = pneg %p227
      %s488 = ssub.s32 1, %s23
      %p489 = scmp.lt.s32.totalorder %s488, 1
      %s490 = scalar_select %p489, %s488, 1
      %s491 = scalar_lea.vmem %s8, %s490
      %p492 = pneg %p258
      %p493 = pneg %p255
      %p494 = pneg %p279
      %p495 = pneg %p276
      %p496 = pneg %p300
      %p497 = pneg %p297
      %p498 = pneg %p326
      %p499 = pneg %p323
      %p500 = scmp.lt.s32.totalorder %s23, 1
      %s501 = scalar_select %p500, %s23, 1
      %s502 = smul.addr %s501, 2
      %s503 = smul.addr %s502, 8
      %s504 = scalar_lea.vmem %s11, %s503
      %p505 = scmp.lt.s32.totalorder %s23, 1
      %s506 = scalar_select %p505, %s23, 1
      %s507 = smul.addr %s506, 2
      %s508 = smul.addr %s507, 8
      %s509 = scalar_lea.vmem %s0, %s508
      %p510 = scmp.lt.s32.totalorder %s23, 1
      %s511 = scalar_select %p510, %s23, 1
      %s512 = smul.addr %s511, 16
      %s513 = smul.addr %s512, 8
      %s514 = scalar_lea.vmem %s1, %s513
      %s515 = ssub.s32 1, %s23
      %p516 = scmp.lt.s32.totalorder %s515, 1
      %s517 = scalar_select %p516, %s515, 1
      %s518 = smul.addr %s517, 16
      %s519 = smul.addr %s518, 8
      %s520 = scalar_lea.vmem %s2, %s519
      %s521 = ssub.s32 1, %s23
      %p522 = scmp.lt.s32.totalorder %s23, 1
      %s523 = scalar_select %p522, %s23, 1
      %s524 = smul.addr %s523, 2
      %s525 = smul.addr %s524, 8
      %s526 = scalar_lea.vmem %s3, %s525
      %p527 = scmp.lt.s32.totalorder %s23, 1
      %s528 = scalar_select %p527, %s23, 1
      %s529 = smul.addr %s528, 2
      %s530 = smul.addr %s529, 8
      %s531 = scalar_lea.vmem %s4, %s530
      %p532 = scmp.lt.s32.totalorder %s23, 1
      %s533 = scalar_select %p532, %s23, 1
      %s534 = smul.addr %s533, 2
      %s535 = smul.addr %s534, 8
      %s536 = scalar_lea.vmem %s5, %s535
      %p537 = scmp.lt.s32.totalorder %s23, 1
      %s538 = scalar_select %p537, %s23, 1
      %s539 = scalar_lea.vmem %s6, %s538
      %s540 = ssub.s32 1, %s23
      %p541 = scmp.lt.s32.totalorder %s540, 1
      %s542 = scalar_select %p541, %s540, 1
      %s543 = smul.addr %s542, 2
      %s544 = smul.addr %s543, 8
      %s545 = scalar_lea.vmem %s7, %s544
      %s546 = ssub.s32 1, %s23
      %s547 = ssub.s32 1, %s23
      %p548 = scmp.lt.s32.totalorder %s547, 1
      %s549 = scalar_select %p548, %s547, 1
      %s550 = scalar_lea.vmem %s8, %s549
      %s551 = ssub.s32 1, %s23
      %p552 = scmp.lt.s32.totalorder %s23, 1
      %s553 = scalar_select %p552, %s23, 1
      %s554 = smul.addr %s553, 2
      %s555 = smul.addr %s554, 8
      %s556 = scalar_lea.vmem %s11, %s555
      %v557 = vld [vmem:[%s509] sm:$0xff]
      %v558 = vld [vmem:[%s509 + $0x8] sm:$0xff]
      %v559 = vld [vmem:[%s526] sm:$0xff]
      %v560 = vld [vmem:[%s526 + $0x8] sm:$0xff]
      %v561 = vld [vmem:[%s531] sm:$0xff]
      %v562 = vld [vmem:[%s531 + $0x8] sm:$0xff]
      %564 = vset.pattern.permute.xlu0 0
      %565 = vperm.xlu0 %564, %v561
      %v566 = vpop.permute.xlu0 %565
      %569 = vset.pattern.permute.xlu0 0
      %570 = vperm.xlu0 %569, %v562
      %v571 = vpop.permute.xlu0 %570
      %vm573 = vcmask 130048
      %v575 = vsel %vm573, %v559, 0
      %v578 = vsel %vm573, %v560, 0
      %580 = vmatprep.subr.mxu0 0.0
      %581 = vmatpush1.msra.mxu0 %v557
      %582 = vmatprep.subr.mxu0 0.0
      %583 = vmatpush1.msra.mxu0 %v558
      %584 = vmatprep.subr.mxu0 0.0
      %585 = vmatpush1.msra.mxu0 0.0
      %586 = vmatprep.subr.mxu0 0.0
      %587 = vmatpush1.msra.mxu0 0.0
      %588 = vmatprep.subr.mxu0 0.0
      %589 = vmatpush1.msra.mxu0 0.0
      %590 = vmatprep.subr.mxu0 0.0
      %591 = vmatpush1.msra.mxu0 0.0
      %592 = vmatprep.subr.mxu0 0.0
      %593 = vmatpush1.msra.mxu0 0.0
      %594 = vmatprep.subr.mxu0 0.0
      %595 = vmatpush1.msra.mxu0 0.0
      %596 = vmatprep.subr.mxu0 0.0
      %597 = vmatpush1.msra.mxu0 0.0
      %598 = vmatprep.subr.mxu0 0.0
      %599 = vmatpush1.msra.mxu0 0.0
      %600 = vmatprep.subr.mxu0 0.0
      %601 = vmatpush1.msra.mxu0 0.0
      %602 = vmatprep.subr.mxu0 0.0
      %603 = vmatpush1.msra.mxu0 0.0
      %604 = vmatprep.subr.mxu0 0.0
      %605 = vmatpush1.msra.mxu0 0.0
      %606 = vmatprep.subr.mxu0 0.0
      %607 = vmatpush1.msra.mxu0 0.0
      %608 = vmatprep.subr.mxu0 0.0
      %609 = vmatpush1.msra.mxu0 0.0
      %610 = vmatprep.subr.mxu0 0.0
      %611 = vmatpush1.msra.mxu0 0.0
      %612 = vmatprep.subr.mxu0 0.0
      %613 = vmatpush1.msra.mxu0 0.0
      %614 = vmatprep.subr.mxu0 0.0
      %615 = vmatpush1.msra.mxu0 0.0
      %616 = vmatprep.subr.mxu0 0.0
      %617 = vmatpush1.msra.mxu0 0.0
      %618 = vmatprep.subr.mxu0 0.0
      %619 = vmatpush1.msra.mxu0 0.0
      %620 = vmatprep.subr.mxu0 0.0
      %621 = vmatpush1.msra.mxu0 0.0
      %622 = vmatprep.subr.mxu0 0.0
      %623 = vmatpush1.msra.mxu0 0.0
      %624 = vmatprep.subr.mxu0 0.0
      %625 = vmatpush1.msra.mxu0 0.0
      %626 = vmatprep.subr.mxu0 0.0
      %627 = vmatpush1.msra.mxu0 0.0
      %628 = vmatprep.subr.mxu0 0.0
      %629 = vmatpush1.msra.mxu0 0.0
      %630 = vmatprep.subr.mxu0 0.0
      %631 = vmatpush1.msra.mxu0 0.0
      %632 = vmatprep.subr.mxu0 0.0
      %633 = vmatpush1.msra.mxu0 0.0
      %634 = vmatprep.subr.mxu0 0.0
      %635 = vmatpush1.msra.mxu0 0.0
      %636 = vmatprep.subr.mxu0 0.0
      %637 = vmatpush1.msra.mxu0 0.0
      %638 = vmatprep.subr.mxu0 0.0
      %639 = vmatpush1.msra.mxu0 0.0
      %640 = vmatprep.subr.mxu0 0.0
      %641 = vmatpush1.msra.mxu0 0.0
      %642 = vmatprep.subr.mxu0 0.0
      %643 = vmatpush1.msra.mxu0 0.0
      %644 = vmatprep.mubr.f32.mxu0 0.0
      %645 = vmatmul.mubr.f32.gmra.mrb[0].mxu0 %v575
      %v646 = vpop.f32.mrb[0].mxu0
      %v647 = vadd.f32 %v566, %v646
      %v648 = vpop.f32.mrb[0].mxu0
      %649 = vmatprep.mubr.f32.mxu0 0.0
      %650 = vmatmul.mubr.f32.gmra.mrb[0].mxu0 %v578
      %v651 = vpop.f32.mrb[0].mxu0
      %v652 = vadd.f32 %v571, %v651
      %v653 = vpop.f32.mrb[0].mxu0
      %654 = vdwg.mxu0
      %v655 = vld [vmem:[%s514] sm:$0xff]
      %v656 = vld [vmem:[%s514 + $0x8] sm:$0xff]
      %v657 = vld [vmem:[%s514 + $0x10] sm:$0xff]
      %v658 = vld [vmem:[%s514 + $0x18] sm:$0xff]
      %v659 = vld [vmem:[%s514 + $0x20] sm:$0xff]
      %v660 = vld [vmem:[%s514 + $0x28] sm:$0xff]
      %v661 = vld [vmem:[%s514 + $0x30] sm:$0xff]
      %v662 = vld [vmem:[%s514 + $0x38] sm:$0xff]
      %v663 = vld [vmem:[%s514 + $0x40] sm:$0xff]
      %v664 = vld [vmem:[%s514 + $0x48] sm:$0xff]
      %v665 = vld [vmem:[%s514 + $0x50] sm:$0xff]
      %v666 = vld [vmem:[%s514 + $0x58] sm:$0xff]
      %v667 = vld [vmem:[%s514 + $0x60] sm:$0xff]
      %v668 = vld [vmem:[%s514 + $0x68] sm:$0xff]
      %v669 = vld [vmem:[%s514 + $0x70] sm:$0xff]
      %v670 = vld [vmem:[%s514 + $0x78] sm:$0xff]
      %v671 = vld [vmem:[%s536] sm:$0xff]
      %v672 = vld [vmem:[%s536 + $0x8] sm:$0xff]
      %v673 = vld [vmem:[%s539] sm:$0x1]
      %v675 = vlaneseq
      %v676 = vshrl.u32 %v675, 7
      %v677 = vsub.s32 0, %v676
      %v678 = vrot.slane %v673, %v677
      %v681 = vsel %vm573, %v655, 0
      %v684 = vsel %vm573, %v656, 0
      %v687 = vsel %vm573, %v657, 0
      %v690 = vsel %vm573, %v658, 0
      %v693 = vsel %vm573, %v659, 0
      %v696 = vsel %vm573, %v660, 0
      %v699 = vsel %vm573, %v661, 0
      %v702 = vsel %vm573, %v662, 0
      %v705 = vsel %vm573, %v663, 0
      %v708 = vsel %vm573, %v664, 0
      %v711 = vsel %vm573, %v665, 0
      %v714 = vsel %vm573, %v666, 0
      %v717 = vsel %vm573, %v667, 0
      %v720 = vsel %vm573, %v668, 0
      %v723 = vsel %vm573, %v669, 0
      %v726 = vsel %vm573, %v670, 0
      %728 = vmatprep.subr.mxu0 0.0
      %729 = vmatpush1.msra.mxu0 %v671
      %730 = vmatprep.subr.mxu0 0.0
      %731 = vmatpush1.msra.mxu0 %v672
      %732 = vmatprep.subr.mxu0 0.0
      %733 = vmatpush1.msra.mxu0 0.0
      %734 = vmatprep.subr.mxu0 0.0
      %735 = vmatpush1.msra.mxu0 0.0
      %736 = vmatprep.subr.mxu0 0.0
      %737 = vmatpush1.msra.mxu0 0.0
      %738 = vmatprep.subr.mxu0 0.0
      %739 = vmatpush1.msra.mxu0 0.0
      %740 = vmatprep.subr.mxu0 0.0
      %741 = vmatpush1.msra.mxu0 0.0
      %742 = vmatprep.subr.mxu0 0.0
      %743 = vmatpush1.msra.mxu0 0.0
      %744 = vmatprep.subr.mxu0 0.0
      %745 = vmatpush1.msra.mxu0 0.0
      %746 = vmatprep.subr.mxu0 0.0
      %747 = vmatpush1.msra.mxu0 0.0
      %748 = vmatprep.subr.mxu0 0.0
      %749 = vmatpush1.msra.mxu0 0.0
      %750 = vmatprep.subr.mxu0 0.0
      %751 = vmatpush1.msra.mxu0 0.0
      %752 = vmatprep.subr.mxu0 0.0
      %753 = vmatpush1.msra.mxu0 0.0
      %754 = vmatprep.subr.mxu0 0.0
      %755 = vmatpush1.msra.mxu0 0.0
      %756 = vmatprep.subr.mxu0 0.0
      %757 = vmatpush1.msra.mxu0 0.0
      %758 = vmatprep.subr.mxu0 0.0
      %759 = vmatpush1.msra.mxu0 0.0
      %760 = vmatprep.subr.mxu0 0.0
      %761 = vmatpush1.msra.mxu0 0.0
      %762 = vmatprep.subr.mxu0 0.0
      %763 = vmatpush1.msra.mxu0 0.0
      %764 = vmatprep.subr.mxu0 0.0
      %765 = vmatpush1.msra.mxu0 0.0
      %766 = vmatprep.subr.mxu0 0.0
      %767 = vmatpush1.msra.mxu0 0.0
      %768 = vmatprep.subr.mxu0 0.0
      %769 = vmatpush1.msra.mxu0 0.0
      %770 = vmatprep.subr.mxu0 0.0
      %771 = vmatpush1.msra.mxu0 0.0
      %772 = vmatprep.subr.mxu0 0.0
      %773 = vmatpush1.msra.mxu0 0.0
      %774 = vmatprep.subr.mxu0 0.0
      %775 = vmatpush1.msra.mxu0 0.0
      %776 = vmatprep.subr.mxu0 0.0
      %777 = vmatpush1.msra.mxu0 0.0
      %778 = vmatprep.subr.mxu0 0.0
      %779 = vmatpush1.msra.mxu0 0.0
      %780 = vmatprep.subr.mxu0 0.0
      %781 = vmatpush1.msra.mxu0 0.0
      %782 = vmatprep.subr.mxu0 0.0
      %783 = vmatpush1.msra.mxu0 0.0
      %784 = vmatprep.subr.mxu0 0.0
      %785 = vmatpush1.msra.mxu0 0.0
      %786 = vmatprep.subr.mxu0 0.0
      %787 = vmatpush1.msra.mxu0 0.0
      %788 = vmatprep.subr.mxu0 0.0
      %789 = vmatpush1.msra.mxu0 0.0
      %790 = vmatprep.subr.mxu0 0.0
      %791 = vmatpush1.msra.mxu0 0.0
      %792 = vmatprep.mubr.f32.mxu0 0.0
      %793 = vmatmul.mubr.f32.gmra.mrb[0].mxu0 %v681
      %v794 = vpop.f32.mrb[0].mxu0
      %v795 = vadd.f32 %v678, %v794
      %v796 = vpop.f32.mrb[0].mxu0
      %797 = vmatprep.mubr.f32.mxu0 0.0
      %798 = vmatmul.mubr.f32.gmra.mrb[0].mxu0 %v684
      %v799 = vpop.f32.mrb[0].mxu0
      %v800 = vadd.f32 %v678, %v799
      %v801 = vpop.f32.mrb[0].mxu0
      %802 = vmatprep.mubr.f32.mxu0 0.0
      %803 = vmatmul.mubr.f32.gmra.mrb[0].mxu0 %v687
      %v804 = vpop.f32.mrb[0].mxu0
      %v805 = vadd.f32 %v678, %v804
      %v806 = vpop.f32.mrb[0].mxu0
      %807 = vmatprep.mubr.f32.mxu0 0.0
      %808 = vmatmul.mubr.f32.gmra.mrb[0].mxu0 %v690
      %v809 = vpop.f32.mrb[0].mxu0
      %v810 = vadd.f32 %v678, %v809
      %v811 = vpop.f32.mrb[0].mxu0
      %812 = vmatprep.mubr.f32.mxu0 0.0
      %813 = vmatmul.mubr.f32.gmra.mrb[0].mxu0 %v693
      %v814 = vpop.f32.mrb[0].mxu0
      %v815 = vadd.f32 %v678, %v814
      %v816 = vpop.f32.mrb[0].mxu0
      %817 = vmatprep.mubr.f32.mxu0 0.0
      %818 = vmatmul.mubr.f32.gmra.mrb[0].mxu0 %v696
      %v819 = vpop.f32.mrb[0].mxu0
      %v820 = vadd.f32 %v678, %v819
      %v821 = vpop.f32.mrb[0].mxu0
      %822 = vmatprep.mubr.f32.mxu0 0.0
      %823 = vmatmul.mubr.f32.gmra.mrb[0].mxu0 %v699
      %v824 = vpop.f32.mrb[0].mxu0
      %v825 = vadd.f32 %v678, %v824
      %v826 = vpop.f32.mrb[0].mxu0
      %827 = vmatprep.mubr.f32.mxu0 0.0
      %828 = vmatmul.mubr.f32.gmra.mrb[0].mxu0 %v702
      %v829 = vpop.f32.mrb[0].mxu0
      %v830 = vadd.f32 %v678, %v829
      %v831 = vpop.f32.mrb[0].mxu0
      %832 = vmatprep.mubr.f32.mxu0 0.0
      %833 = vmatmul.mubr.f32.gmra.mrb[0].mxu0 %v705
      %v834 = vpop.f32.mrb[0].mxu0
      %v835 = vadd.f32 %v678, %v834
      %v836 = vpop.f32.mrb[0].mxu0
      %837 = vmatprep.mubr.f32.mxu0 0.0
      %838 = vmatmul.mubr.f32.gmra.mrb[0].mxu0 %v708
      %v839 = vpop.f32.mrb[0].mxu0
      %v840 = vadd.f32 %v678, %v839
      %v841 = vpop.f32.mrb[0].mxu0
      %842 = vmatprep.mubr.f32.mxu0 0.0
      %843 = vmatmul.mubr.f32.gmra.mrb[0].mxu0 %v711
      %v844 = vpop.f32.mrb[0].mxu0
      %v845 = vadd.f32 %v678, %v844
      %v846 = vpop.f32.mrb[0].mxu0
      %847 = vmatprep.mubr.f32.mxu0 0.0
      %848 = vmatmul.mubr.f32.gmra.mrb[0].mxu0 %v714
      %v849 = vpop.f32.mrb[0].mxu0
      %v850 = vadd.f32 %v678, %v849
      %v851 = vpop.f32.mrb[0].mxu0
      %852 = vmatprep.mubr.f32.mxu0 0.0
      %853 = vmatmul.mubr.f32.gmra.mrb[0].mxu0 %v717
      %v854 = vpop.f32.mrb[0].mxu0
      %v855 = vadd.f32 %v678, %v854
      %v856 = vpop.f32.mrb[0].mxu0
      %857 = vmatprep.mubr.f32.mxu0 0.0
      %858 = vmatmul.mubr.f32.gmra.mrb[0].mxu0 %v720
      %v859 = vpop.f32.mrb[0].mxu0
      %v860 = vadd.f32 %v678, %v859
      %v861 = vpop.f32.mrb[0].mxu0
      %862 = vmatprep.mubr.f32.mxu0 0.0
      %863 = vmatmul.mubr.f32.gmra.mrb[0].mxu0 %v723
      %v864 = vpop.f32.mrb[0].mxu0
      %v865 = vadd.f32 %v678, %v864
      %v866 = vpop.f32.mrb[0].mxu0
      %867 = vmatprep.mubr.f32.mxu0 0.0
      %868 = vmatmul.mubr.f32.gmra.mrb[0].mxu0 %v726
      %v869 = vpop.f32.mrb[0].mxu0
      %v870 = vadd.f32 %v678, %v869
      %v871 = vpop.f32.mrb[0].mxu0
      %872 = vdwg.mxu0
      %v873 = vld [vmem:[%s520] sm:$0xff]
      %v874 = vld [vmem:[%s520 + $0x8] sm:$0xff]
      %v875 = vld [vmem:[%s520 + $0x10] sm:$0xff]
      %v876 = vld [vmem:[%s520 + $0x18] sm:$0xff]
      %v877 = vld [vmem:[%s520 + $0x20] sm:$0xff]
      %v878 = vld [vmem:[%s520 + $0x28] sm:$0xff]
      %v879 = vld [vmem:[%s520 + $0x30] sm:$0xff]
      %v880 = vld [vmem:[%s520 + $0x38] sm:$0xff]
      %v881 = vld [vmem:[%s520 + $0x40] sm:$0xff]
      %v882 = vld [vmem:[%s520 + $0x48] sm:$0xff]
      %v883 = vld [vmem:[%s520 + $0x50] sm:$0xff]
      %v884 = vld [vmem:[%s520 + $0x58] sm:$0xff]
      %v885 = vld [vmem:[%s520 + $0x60] sm:$0xff]
      %v886 = vld [vmem:[%s520 + $0x68] sm:$0xff]
      %v887 = vld [vmem:[%s520 + $0x70] sm:$0xff]
      %v888 = vld [vmem:[%s520 + $0x78] sm:$0xff]
      %v889 = vld [vmem:[%s545] sm:$0xff]
      %v890 = vld [vmem:[%s545 + $0x8] sm:$0xff]
      %v891 = vld [vmem:[%s550] sm:$0x1]
      %v893 = vlaneseq
      %v894 = vshrl.u32 %v893, 7
      %v895 = vsub.s32 0, %v894
      %v896 = vrot.slane %v891, %v895
      %v899 = vsel %vm573, %v873, 0
      %v902 = vsel %vm573, %v874, 0
      %v905 = vsel %vm573, %v875, 0
      %v908 = vsel %vm573, %v876, 0
      %v911 = vsel %vm573, %v877, 0
      %v914 = vsel %vm573, %v878, 0
      %v917 = vsel %vm573, %v879, 0
      %v920 = vsel %vm573, %v880, 0
      %v923 = vsel %vm573, %v881, 0
      %v926 = vsel %vm573, %v882, 0
      %v929 = vsel %vm573, %v883, 0
      %v932 = vsel %vm573, %v884, 0
      %v935 = vsel %vm573, %v885, 0
      %v938 = vsel %vm573, %v886, 0
      %v941 = vsel %vm573, %v887, 0
      %v944 = vsel %vm573, %v888, 0
      %946 = vmatprep.subr.mxu0 0.0
      %947 = vmatpush1.msra.mxu0 %v889
      %948 = vmatprep.subr.mxu0 0.0
      %949 = vmatpush1.msra.mxu0 %v890
      %950 = vmatprep.subr.mxu0 0.0
      %951 = vmatpush1.msra.mxu0 0.0
      %952 = vmatprep.subr.mxu0 0.0
      %953 = vmatpush1.msra.mxu0 0.0
      %954 = vmatprep.subr.mxu0 0.0
      %955 = vmatpush1.msra.mxu0 0.0
      %956 = vmatprep.subr.mxu0 0.0
      %957 = vmatpush1.msra.mxu0 0.0
      %958 = vmatprep.subr.mxu0 0.0
      %959 = vmatpush1.msra.mxu0 0.0
      %960 = vmatprep.subr.mxu0 0.0
      %961 = vmatpush1.msra.mxu0 0.0
      %962 = vmatprep.subr.mxu0 0.0
      %963 = vmatpush1.msra.mxu0 0.0
      %964 = vmatprep.subr.mxu0 0.0
      %965 = vmatpush1.msra.mxu0 0.0
      %966 = vmatprep.subr.mxu0 0.0
      %967 = vmatpush1.msra.mxu0 0.0
      %968 = vmatprep.subr.mxu0 0.0
      %969 = vmatpush1.msra.mxu0 0.0
      %970 = vmatprep.subr.mxu0 0.0
      %971 = vmatpush1.msra.mxu0 0.0
      %972 = vmatprep.subr.mxu0 0.0
      %973 = vmatpush1.msra.mxu0 0.0
      %974 = vmatprep.subr.mxu0 0.0
      %975 = vmatpush1.msra.mxu0 0.0
      %976 = vmatprep.subr.mxu0 0.0
      %977 = vmatpush1.msra.mxu0 0.0
      %978 = vmatprep.subr.mxu0 0.0
      %979 = vmatpush1.msra.mxu0 0.0
      %980 = vmatprep.subr.mxu0 0.0
      %981 = vmatpush1.msra.mxu0 0.0
      %982 = vmatprep.subr.mxu0 0.0
      %983 = vmatpush1.msra.mxu0 0.0
      %984 = vmatprep.subr.mxu0 0.0
      %985 = vmatpush1.msra.mxu0 0.0
      %986 = vmatprep.subr.mxu0 0.0
      %987 = vmatpush1.msra.mxu0 0.0
      %988 = vmatprep.subr.mxu0 0.0
      %989 = vmatpush1.msra.mxu0 0.0
      %990 = vmatprep.subr.mxu0 0.0
      %991 = vmatpush1.msra.mxu0 0.0
      %992 = vmatprep.subr.mxu0 0.0
      %993 = vmatpush1.msra.mxu0 0.0
      %994 = vmatprep.subr.mxu0 0.0
      %995 = vmatpush1.msra.mxu0 0.0
      %996 = vmatprep.subr.mxu0 0.0
      %997 = vmatpush1.msra.mxu0 0.0
      %998 = vmatprep.subr.mxu0 0.0
      %999 = vmatpush1.msra.mxu0 0.0
      %1000 = vmatprep.subr.mxu0 0.0
      %1001 = vmatpush1.msra.mxu0 0.0
      %1002 = vmatprep.subr.mxu0 0.0
      %1003 = vmatpush1.msra.mxu0 0.0
      %1004 = vmatprep.subr.mxu0 0.0
      %1005 = vmatpush1.msra.mxu0 0.0
      %1006 = vmatprep.subr.mxu0 0.0
      %1007 = vmatpush1.msra.mxu0 0.0
      %1008 = vmatprep.subr.mxu0 0.0
      %1009 = vmatpush1.msra.mxu0 0.0
      %1010 = vmatprep.mubr.f32.mxu0 0.0
      %1011 = vmatmul.mubr.f32.gmra.mrb[0].mxu0 %v899
      %v1012 = vpop.f32.mrb[0].mxu0
      %v1013 = vadd.f32 %v896, %v1012
      %v1014 = vpop.f32.mrb[0].mxu0
      %1015 = vmatprep.mubr.f32.mxu0 0.0
      %1016 = vmatmul.mubr.f32.gmra.mrb[0].mxu0 %v902
      %v1017 = vpop.f32.mrb[0].mxu0
      %v1018 = vadd.f32 %v896, %v1017
      %v1019 = vpop.f32.mrb[0].mxu0
      %1020 = vmatprep.mubr.f32.mxu0 0.0
      %1021 = vmatmul.mubr.f32.gmra.mrb[0].mxu0 %v905
      %v1022 = vpop.f32.mrb[0].mxu0
      %v1023 = vadd.f32 %v896, %v1022
      %v1024 = vpop.f32.mrb[0].mxu0
      %1025 = vmatprep.mubr.f32.mxu0 0.0
      %1026 = vmatmul.mubr.f32.gmra.mrb[0].mxu0 %v908
      %v1027 = vpop.f32.mrb[0].mxu0
      %v1028 = vadd.f32 %v896, %v1027
      %v1029 = vpop.f32.mrb[0].mxu0
      %1030 = vmatprep.mubr.f32.mxu0 0.0
      %1031 = vmatmul.mubr.f32.gmra.mrb[0].mxu0 %v911
      %v1032 = vpop.f32.mrb[0].mxu0
      %v1033 = vadd.f32 %v896, %v1032
      %v1034 = vpop.f32.mrb[0].mxu0
      %1035 = vmatprep.mubr.f32.mxu0 0.0
      %1036 = vmatmul.mubr.f32.gmra.mrb[0].mxu0 %v914
      %v1037 = vpop.f32.mrb[0].mxu0
      %v1038 = vadd.f32 %v896, %v1037
      %v1039 = vpop.f32.mrb[0].mxu0
      %1040 = vmatprep.mubr.f32.mxu0 0.0
      %1041 = vmatmul.mubr.f32.gmra.mrb[0].mxu0 %v917
      %v1042 = vpop.f32.mrb[0].mxu0
      %v1043 = vadd.f32 %v896, %v1042
      %v1044 = vpop.f32.mrb[0].mxu0
      %1045 = vmatprep.mubr.f32.mxu0 0.0
      %1046 = vmatmul.mubr.f32.gmra.mrb[0].mxu0 %v920
      %v1047 = vpop.f32.mrb[0].mxu0
      %v1048 = vadd.f32 %v896, %v1047
      %v1049 = vpop.f32.mrb[0].mxu0
      %1050 = vmatprep.mubr.f32.mxu0 0.0
      %1051 = vmatmul.mubr.f32.gmra.mrb[0].mxu0 %v923
      %v1052 = vpop.f32.mrb[0].mxu0
      %v1053 = vadd.f32 %v896, %v1052
      %v1054 = vpop.f32.mrb[0].mxu0
      %1055 = vmatprep.mubr.f32.mxu0 0.0
      %1056 = vmatmul.mubr.f32.gmra.mrb[0].mxu0 %v926
      %v1057 = vpop.f32.mrb[0].mxu0
      %v1058 = vadd.f32 %v896, %v1057
      %v1059 = vpop.f32.mrb[0].mxu0
      %1060 = vmatprep.mubr.f32.mxu0 0.0
      %1061 = vmatmul.mubr.f32.gmra.mrb[0].mxu0 %v929
      %v1062 = vpop.f32.mrb[0].mxu0
      %v1063 = vadd.f32 %v896, %v1062
      %v1064 = vpop.f32.mrb[0].mxu0
      %1065 = vmatprep.mubr.f32.mxu0 0.0
      %1066 = vmatmul.mubr.f32.gmra.mrb[0].mxu0 %v932
      %v1067 = vpop.f32.mrb[0].mxu0
      %v1068 = vadd.f32 %v896, %v1067
      %v1069 = vpop.f32.mrb[0].mxu0
      %1070 = vmatprep.mubr.f32.mxu0 0.0
      %1071 = vmatmul.mubr.f32.gmra.mrb[0].mxu0 %v935
      %v1072 = vpop.f32.mrb[0].mxu0
      %v1073 = vadd.f32 %v896, %v1072
      %v1074 = vpop.f32.mrb[0].mxu0
      %1075 = vmatprep.mubr.f32.mxu0 0.0
      %1076 = vmatmul.mubr.f32.gmra.mrb[0].mxu0 %v938
      %v1077 = vpop.f32.mrb[0].mxu0
      %v1078 = vadd.f32 %v896, %v1077
      %v1079 = vpop.f32.mrb[0].mxu0
      %1080 = vmatprep.mubr.f32.mxu0 0.0
      %1081 = vmatmul.mubr.f32.gmra.mrb[0].mxu0 %v941
      %v1082 = vpop.f32.mrb[0].mxu0
      %v1083 = vadd.f32 %v896, %v1082
      %v1084 = vpop.f32.mrb[0].mxu0
      %1085 = vmatprep.mubr.f32.mxu0 0.0
      %1086 = vmatmul.mubr.f32.gmra.mrb[0].mxu0 %v944
      %v1087 = vpop.f32.mrb[0].mxu0
      %v1088 = vadd.f32 %v896, %v1087
      %v1089 = vpop.f32.mrb[0].mxu0
      %1090 = vdwg.mxu0
      %v1091 = vld [vmem:[%s9] sm:$0xff]
      %v1092 = vld [vmem:[%s9 + $0x8] sm:$0xff]
      %v1093 = vld [vmem:[%s9 + $0x10] sm:$0xff]
      %v1094 = vld [vmem:[%s9 + $0x18] sm:$0xff]
      %v1095 = vld [vmem:[%s9 + $0x20] sm:$0xff]
      %v1096 = vld [vmem:[%s9 + $0x28] sm:$0xff]
      %v1097 = vld [vmem:[%s9 + $0x30] sm:$0xff]
      %v1098 = vld [vmem:[%s9 + $0x38] sm:$0xff]
      %v1099 = vld [vmem:[%s9 + $0x40] sm:$0xff]
      %v1100 = vld [vmem:[%s9 + $0x48] sm:$0xff]
      %v1101 = vld [vmem:[%s9 + $0x50] sm:$0xff]
      %v1102 = vld [vmem:[%s9 + $0x58] sm:$0xff]
      %v1103 = vld [vmem:[%s9 + $0x60] sm:$0xff]
      %v1104 = vld [vmem:[%s9 + $0x68] sm:$0xff]
      %v1105 = vld [vmem:[%s9 + $0x70] sm:$0xff]
      %v1106 = vld [vmem:[%s9 + $0x78] sm:$0xff]
      %vm1107 = vcmask 64512
      %v1109 = vsel %vm1107, %v795, 0
      %v1112 = vsel %vm1107, %v800, 0
      %v1115 = vsel %vm1107, %v805, 0
      %v1118 = vsel %vm1107, %v810, 0
      %v1121 = vsel %vm1107, %v815, 0
      %v1124 = vsel %vm1107, %v820, 0
      %v1127 = vsel %vm1107, %v825, 0
      %v1130 = vsel %vm1107, %v830, 0
      %v1133 = vsel %vm1107, %v835, 0
      %v1136 = vsel %vm1107, %v840, 0
      %v1139 = vsel %vm1107, %v845, 0
      %v1142 = vsel %vm1107, %v850, 0
      %v1145 = vsel %vm1107, %v855, 0
      %v1148 = vsel %vm1107, %v860, 0
      %v1151 = vsel %vm1107, %v865, 0
      %v1154 = vsel %vm1107, %v870, 0
      %v1157 = vsel %vm1107, %v1013, 0
      %v1160 = vsel %vm1107, %v1018, 0
      %v1163 = vsel %vm1107, %v1023, 0
      %v1166 = vsel %vm1107, %v1028, 0
      %v1169 = vsel %vm1107, %v1033, 0
      %v1172 = vsel %vm1107, %v1038, 0
      %v1175 = vsel %vm1107, %v1043, 0
      %v1178 = vsel %vm1107, %v1048, 0
      %v1181 = vsel %vm1107, %v1053, 0
      %v1184 = vsel %vm1107, %v1058, 0
      %v1187 = vsel %vm1107, %v1063, 0
      %v1190 = vsel %vm1107, %v1068, 0
      %v1193 = vsel %vm1107, %v1073, 0
      %v1196 = vsel %vm1107, %v1078, 0
      %v1199 = vsel %vm1107, %v1083, 0
      %v1202 = vsel %vm1107, %v1088, 0
      %1204 = vmatprep.subr.mxu0 0.0
      %1205 = vmatpush1.xpose.msra.mxu0 %v1157
      %1206 = vmatprep.subr.mxu0 0.0
      %1207 = vmatpush1.xpose.msra.mxu0 %v1160
      %1208 = vmatprep.subr.mxu0 0.0
      %1209 = vmatpush1.xpose.msra.mxu0 %v1163
      %1210 = vmatprep.subr.mxu0 0.0
      %1211 = vmatpush1.xpose.msra.mxu0 %v1166
      %1212 = vmatprep.subr.mxu0 0.0
      %1213 = vmatpush1.xpose.msra.mxu0 %v1169
      %1214 = vmatprep.subr.mxu0 0.0
      %1215 = vmatpush1.xpose.msra.mxu0 %v1172
      %1216 = vmatprep.subr.mxu0 0.0
      %1217 = vmatpush1.xpose.msra.mxu0 %v1175
      %1218 = vmatprep.subr.mxu0 0.0
      %1219 = vmatpush1.xpose.msra.mxu0 %v1178
      %1220 = vmatprep.subr.mxu0 0.0
      %1221 = vmatpush1.xpose.msra.mxu0 %v1181
      %1222 = vmatprep.subr.mxu0 0.0
      %1223 = vmatpush1.xpose.msra.mxu0 %v1184
      %1224 = vmatprep.subr.mxu0 0.0
      %1225 = vmatpush1.xpose.msra.mxu0 %v1187
      %1226 = vmatprep.subr.mxu0 0.0
      %1227 = vmatpush1.xpose.msra.mxu0 %v1190
      %1228 = vmatprep.subr.mxu0 0.0
      %1229 = vmatpush1.xpose.msra.mxu0 %v1193
      %1230 = vmatprep.subr.mxu0 0.0
      %1231 = vmatpush1.xpose.msra.mxu0 %v1196
      %1232 = vmatprep.subr.mxu0 0.0
      %1233 = vmatpush1.xpose.msra.mxu0 %v1199
      %1234 = vmatprep.subr.mxu0 0.0
      %1235 = vmatpush1.xpose.msra.mxu0 %v1202
      %1236 = vmatprep.subr.mxu0 0.0
      %1237 = vmatpush1.xpose.msra.mxu0 0.0
      %1238 = vmatprep.subr.mxu0 0.0
      %1239 = vmatpush1.xpose.msra.mxu0 0.0
      %1240 = vmatprep.subr.mxu0 0.0
      %1241 = vmatpush1.xpose.msra.mxu0 0.0
      %1242 = vmatprep.subr.mxu0 0.0
      %1243 = vmatpush1.xpose.msra.mxu0 0.0
      %1244 = vmatprep.subr.mxu0 0.0
      %1245 = vmatpush1.xpose.msra.mxu0 0.0
      %1246 = vmatprep.subr.mxu0 0.0
      %1247 = vmatpush1.xpose.msra.mxu0 0.0
      %1248 = vmatprep.subr.mxu0 0.0
      %1249 = vmatpush1.xpose.msra.mxu0 0.0
      %1250 = vmatprep.subr.mxu0 0.0
      %1251 = vmatpush1.xpose.msra.mxu0 0.0
      %1252 = vmatprep.subr.mxu0 0.0
      %1253 = vmatpush1.xpose.msra.mxu0 0.0
      %1254 = vmatprep.subr.mxu0 0.0
      %1255 = vmatpush1.xpose.msra.mxu0 0.0
      %1256 = vmatprep.subr.mxu0 0.0
      %1257 = vmatpush1.xpose.msra.mxu0 0.0
      %1258 = vmatprep.subr.mxu0 0.0
      %1259 = vmatpush1.xpose.msra.mxu0 0.0
      %1260 = vmatprep.subr.mxu0 0.0
      %1261 = vmatpush1.xpose.msra.mxu0 0.0
      %1262 = vmatprep.subr.mxu0 0.0
      %1263 = vmatpush1.xpose.msra.mxu0 0.0
      %1264 = vmatprep.subr.mxu0 0.0
      %1265 = vmatpush1.xpose.msra.mxu0 0.0
      %1266 = vmatprep.subr.mxu0 0.0
      %1267 = vmatpush1.xpose.msra.mxu0 0.0
      %1268 = vmatprep.mubr.f32.mxu0 0.0
      %1269 = vmatmul.mubr.f32.gmra.mrb[0].mxu0 %v1109
      %v1270 = vpop.f32.mrb[0].mxu0
      %v1271 = vadd.f32 %v1091, %v1270
      %v1272 = vpop.f32.mrb[0].mxu0
      %1273 = vmatprep.mubr.f32.mxu0 0.0
      %1274 = vmatmul.mubr.f32.gmra.mrb[0].mxu0 %v1112
      %v1275 = vpop.f32.mrb[0].mxu0
      %v1276 = vadd.f32 %v1092, %v1275
      %v1277 = vpop.f32.mrb[0].mxu0
      %1278 = vmatprep.mubr.f32.mxu0 0.0
      %1279 = vmatmul.mubr.f32.gmra.mrb[0].mxu0 %v1115
      %v1280 = vpop.f32.mrb[0].mxu0
      %v1281 = vadd.f32 %v1093, %v1280
      %v1282 = vpop.f32.mrb[0].mxu0
      %1283 = vmatprep.mubr.f32.mxu0 0.0
      %1284 = vmatmul.mubr.f32.gmra.mrb[0].mxu0 %v1118
      %v1285 = vpop.f32.mrb[0].mxu0
      %v1286 = vadd.f32 %v1094, %v1285
      %v1287 = vpop.f32.mrb[0].mxu0
      %1288 = vmatprep.mubr.f32.mxu0 0.0
      %1289 = vmatmul.mubr.f32.gmra.mrb[0].mxu0 %v1121
      %v1290 = vpop.f32.mrb[0].mxu0
      %v1291 = vadd.f32 %v1095, %v1290
      %v1292 = vpop.f32.mrb[0].mxu0
      %1293 = vmatprep.mubr.f32.mxu0 0.0
      %1294 = vmatmul.mubr.f32.gmra.mrb[0].mxu0 %v1124
      %v1295 = vpop.f32.mrb[0].mxu0
      %v1296 = vadd.f32 %v1096, %v1295
      %v1297 = vpop.f32.mrb[0].mxu0
      %1298 = vmatprep.mubr.f32.mxu0 0.0
      %1299 = vmatmul.mubr.f32.gmra.mrb[0].mxu0 %v1127
      %v1300 = vpop.f32.mrb[0].mxu0
      %v1301 = vadd.f32 %v1097, %v1300
      %v1302 = vpop.f32.mrb[0].mxu0
      %1303 = vmatprep.mubr.f32.mxu0 0.0
      %1304 = vmatmul.mubr.f32.gmra.mrb[0].mxu0 %v1130
      %v1305 = vpop.f32.mrb[0].mxu0
      %v1306 = vadd.f32 %v1098, %v1305
      %v1307 = vpop.f32.mrb[0].mxu0
      %1308 = vmatprep.mubr.f32.mxu0 0.0
      %1309 = vmatmul.mubr.f32.gmra.mrb[0].mxu0 %v1133
      %v1310 = vpop.f32.mrb[0].mxu0
      %v1311 = vadd.f32 %v1099, %v1310
      %v1312 = vpop.f32.mrb[0].mxu0
      %1313 = vmatprep.mubr.f32.mxu0 0.0
      %1314 = vmatmul.mubr.f32.gmra.mrb[0].mxu0 %v1136
      %v1315 = vpop.f32.mrb[0].mxu0
      %v1316 = vadd.f32 %v1100, %v1315
      %v1317 = vpop.f32.mrb[0].mxu0
      %1318 = vmatprep.mubr.f32.mxu0 0.0
      %1319 = vmatmul.mubr.f32.gmra.mrb[0].mxu0 %v1139
      %v1320 = vpop.f32.mrb[0].mxu0
      %v1321 = vadd.f32 %v1101, %v1320
      %v1322 = vpop.f32.mrb[0].mxu0
      %1323 = vmatprep.mubr.f32.mxu0 0.0
      %1324 = vmatmul.mubr.f32.gmra.mrb[0].mxu0 %v1142
      %v1325 = vpop.f32.mrb[0].mxu0
      %v1326 = vadd.f32 %v1102, %v1325
      %v1327 = vpop.f32.mrb[0].mxu0
      %1328 = vmatprep.mubr.f32.mxu0 0.0
      %1329 = vmatmul.mubr.f32.gmra.mrb[0].mxu0 %v1145
      %v1330 = vpop.f32.mrb[0].mxu0
      %v1331 = vadd.f32 %v1103, %v1330
      %v1332 = vpop.f32.mrb[0].mxu0
      %1333 = vmatprep.mubr.f32.mxu0 0.0
      %1334 = vmatmul.mubr.f32.gmra.mrb[0].mxu0 %v1148
      %v1335 = vpop.f32.mrb[0].mxu0
      %v1336 = vadd.f32 %v1104, %v1335
      %v1337 = vpop.f32.mrb[0].mxu0
      %1338 = vmatprep.mubr.f32.mxu0 0.0
      %1339 = vmatmul.mubr.f32.gmra.mrb[0].mxu0 %v1151
      %v1340 = vpop.f32.mrb[0].mxu0
      %v1341 = vadd.f32 %v1105, %v1340
      %v1342 = vpop.f32.mrb[0].mxu0
      %1343 = vmatprep.mubr.f32.mxu0 0.0
      %1344 = vmatmul.mubr.f32.gmra.mrb[0].mxu0 %v1154
      %v1345 = vpop.f32.mrb[0].mxu0
      %v1346 = vadd.f32 %v1106, %v1345
      %v1347 = vpop.f32.mrb[0].mxu0
      %1348 = vdwg.mxu0
      %v1349 = vmax.f32 %v1271, %v1291
      %v1350 = vmax.f32 %v1276, %v1296
      %v1351 = vmax.f32 %v1281, %v1301
      %v1352 = vmax.f32 %v1286, %v1306
      %v1353 = vmax.f32 %v1349, %v1311
      %v1354 = vmax.f32 %v1350, %v1316
      %v1355 = vmax.f32 %v1351, %v1321
      %v1356 = vmax.f32 %v1352, %v1326
      %v1357 = vmax.f32 %v1353, %v1331
      %v1358 = vmax.f32 %v1354, %v1336
      %v1359 = vmax.f32 %v1355, %v1341
      %v1360 = vmax.f32 %v1356, %v1346
      %v1361 = vmax.f32 %v1357, %v1358
      %v1362 = vmax.f32 %v1359, %v1360
      %v1363 = vmax.f32 %v1361, %v1362
      %v1364 = vrot.slane %v1363, 4
      %v1365 = vmax.f32 %v1363, %v1364
      %v1366 = vrot.slane %v1365, 2
      %v1367 = vmax.f32 %v1365, %v1366
      %v1368 = vrot.slane %v1367, 1
      %v1369 = vmax.f32 %v1367, %v1368
      %v1370 = vsub.f32 %v1271, %v1369
      %v1371 = vsub.f32 %v1276, %v1369
      %v1372 = vsub.f32 %v1281, %v1369
      %v1373 = vsub.f32 %v1286, %v1369
      %v1374 = vsub.f32 %v1291, %v1369
      %v1375 = vsub.f32 %v1296, %v1369
      %v1376 = vsub.f32 %v1301, %v1369
      %v1377 = vsub.f32 %v1306, %v1369
      %v1378 = vsub.f32 %v1311, %v1369
      %v1379 = vsub.f32 %v1316, %v1369
      %v1380 = vsub.f32 %v1321, %v1369
      %v1381 = vsub.f32 %v1326, %v1369
      %v1382 = vsub.f32 %v1331, %v1369
      %v1383 = vsub.f32 %v1336, %v1369
      %v1384 = vsub.f32 %v1341, %v1369
      %v1385 = vsub.f32 %v1346, %v1369
      %v1386 = vmul.f32 %v1370, 1.442695
      %v1387 = vpow.pop %v1386
      %v1388 = vmul.f32 %v1371, 1.442695
      %v1389 = vpow.pop %v1388
      %v1390 = vmul.f32 %v1372, 1.442695
      %v1391 = vpow.pop %v1390
      %v1392 = vmul.f32 %v1373, 1.442695
      %v1393 = vpow.pop %v1392
      %v1394 = vmul.f32 %v1374, 1.442695
      %v1395 = vpow.pop %v1394
      %v1396 = vmul.f32 %v1375, 1.442695
      %v1397 = vpow.pop %v1396
      %v1398 = vmul.f32 %v1376, 1.442695
      %v1399 = vpow.pop %v1398
      %v1400 = vmul.f32 %v1377, 1.442695
      %v1401 = vpow.pop %v1400
      %v1402 = vmul.f32 %v1378, 1.442695
      %v1403 = vpow.pop %v1402
      %v1404 = vmul.f32 %v1379, 1.442695
      %v1405 = vpow.pop %v1404
      %v1406 = vmul.f32 %v1380, 1.442695
      %v1407 = vpow.pop %v1406
      %v1408 = vmul.f32 %v1381, 1.442695
      %v1409 = vpow.pop %v1408
      %v1410 = vmul.f32 %v1382, 1.442695
      %v1411 = vpow.pop %v1410
      %v1412 = vmul.f32 %v1383, 1.442695
      %v1413 = vpow.pop %v1412
      %v1414 = vmul.f32 %v1384, 1.442695
      %v1415 = vpow.pop %v1414
      %v1416 = vmul.f32 %v1385, 1.442695
      %v1417 = vpow.pop %v1416
      %v1418 = vadd.f32 %v1387, %v1389
      %v1419 = vadd.f32 %v1418, %v1391
      %v1420 = vadd.f32 %v1419, %v1393
      %v1421 = vadd.f32 %v1420, %v1395
      %v1422 = vadd.f32 %v1421, %v1397
      %v1423 = vadd.f32 %v1422, %v1399
      %v1424 = vadd.f32 %v1423, %v1401
      %v1425 = vadd.f32 %v1424, %v1403
      %v1426 = vadd.f32 %v1425, %v1405
      %v1427 = vadd.f32 %v1426, %v1407
      %v1428 = vadd.f32 %v1427, %v1409
      %v1429 = vadd.f32 %v1428, %v1411
      %v1430 = vadd.f32 %v1429, %v1413
      %v1431 = vadd.f32 %v1430, %v1415
      %v1432 = vadd.f32 %v1431, %v1417
      %v1433 = vrot.slane %v1432, 4
      %v1434 = vadd.f32 %v1432, %v1433
      %v1435 = vrot.slane %v1434, 2
      %v1436 = vadd.f32 %v1434, %v1435
      %v1437 = vrot.slane %v1436, 1
      %v1438 = vadd.f32 %v1436, %v1437
      %v1439 = vrcp.pop %v1438
      %v1440 = vmul.f32 1.0, %v1439
      %v1441 = vmul.f32 %v1387, %v1440
      %v1442 = vmul.f32 %v1389, %v1440
      %v1443 = vmul.f32 %v1391, %v1440
      %v1444 = vmul.f32 %v1393, %v1440
      %v1445 = vmul.f32 %v1395, %v1440
      %v1446 = vmul.f32 %v1397, %v1440
      %v1447 = vmul.f32 %v1399, %v1440
      %v1448 = vmul.f32 %v1401, %v1440
      %v1449 = vmul.f32 %v1403, %v1440
      %v1450 = vmul.f32 %v1405, %v1440
      %v1451 = vmul.f32 %v1407, %v1440
      %v1452 = vmul.f32 %v1409, %v1440
      %v1453 = vmul.f32 %v1411, %v1440
      %v1454 = vmul.f32 %v1413, %v1440
      %v1455 = vmul.f32 %v1415, %v1440
      %v1456 = vmul.f32 %v1417, %v1440
      %1457 = vmatprep.subr.mxu0 0.0
      %1458 = vmatpush1.msra.mxu0 %v1441
      %1459 = vmatprep.subr.mxu0 0.0
      %1460 = vmatpush1.msra.mxu0 %v1442
      %1461 = vmatprep.subr.mxu0 0.0
      %1462 = vmatpush1.msra.mxu0 %v1443
      %1463 = vmatprep.subr.mxu0 0.0
      %1464 = vmatpush1.msra.mxu0 %v1444
      %1465 = vmatprep.subr.mxu0 0.0
      %1466 = vmatpush1.msra.mxu0 %v1445
      %1467 = vmatprep.subr.mxu0 0.0
      %1468 = vmatpush1.msra.mxu0 %v1446
      %1469 = vmatprep.subr.mxu0 0.0
      %1470 = vmatpush1.msra.mxu0 %v1447
      %1471 = vmatprep.subr.mxu0 0.0
      %1472 = vmatpush1.msra.mxu0 %v1448
      %1473 = vmatprep.subr.mxu0 0.0
      %1474 = vmatpush1.msra.mxu0 %v1449
      %1475 = vmatprep.subr.mxu0 0.0
      %1476 = vmatpush1.msra.mxu0 %v1450
      %1477 = vmatprep.subr.mxu0 0.0
      %1478 = vmatpush1.msra.mxu0 %v1451
      %1479 = vmatprep.subr.mxu0 0.0
      %1480 = vmatpush1.msra.mxu0 %v1452
      %1481 = vmatprep.subr.mxu0 0.0
      %1482 = vmatpush1.msra.mxu0 %v1453
      %1483 = vmatprep.subr.mxu0 0.0
      %1484 = vmatpush1.msra.mxu0 %v1454
      %1485 = vmatprep.subr.mxu0 0.0
      %1486 = vmatpush1.msra.mxu0 %v1455
      %1487 = vmatprep.subr.mxu0 0.0
      %1488 = vmatpush1.msra.mxu0 %v1456
      %1489 = vmatprep.subr.mxu0 0.0
      %1490 = vmatpush1.msra.mxu0 0.0
      %1491 = vmatprep.subr.mxu0 0.0
      %1492 = vmatpush1.msra.mxu0 0.0
      %1493 = vmatprep.subr.mxu0 0.0
      %1494 = vmatpush1.msra.mxu0 0.0
      %1495 = vmatprep.subr.mxu0 0.0
      %1496 = vmatpush1.msra.mxu0 0.0
      %1497 = vmatprep.subr.mxu0 0.0
      %1498 = vmatpush1.msra.mxu0 0.0
      %1499 = vmatprep.subr.mxu0 0.0
      %1500 = vmatpush1.msra.mxu0 0.0
      %1501 = vmatprep.subr.mxu0 0.0
      %1502 = vmatpush1.msra.mxu0 0.0
      %1503 = vmatprep.subr.mxu0 0.0
      %1504 = vmatpush1.msra.mxu0 0.0
      %1505 = vmatprep.subr.mxu0 0.0
      %1506 = vmatpush1.msra.mxu0 0.0
      %1507 = vmatprep.subr.mxu0 0.0
      %1508 = vmatpush1.msra.mxu0 0.0
      %1509 = vmatprep.subr.mxu0 0.0
      %1510 = vmatpush1.msra.mxu0 0.0
      %1511 = vmatprep.subr.mxu0 0.0
      %1512 = vmatpush1.msra.mxu0 0.0
      %1513 = vmatprep.subr.mxu0 0.0
      %1514 = vmatpush1.msra.mxu0 0.0
      %1515 = vmatprep.subr.mxu0 0.0
      %1516 = vmatpush1.msra.mxu0 0.0
      %1517 = vmatprep.subr.mxu0 0.0
      %1518 = vmatpush1.msra.mxu0 0.0
      %1519 = vmatprep.subr.mxu0 0.0
      %1520 = vmatpush1.msra.mxu0 0.0
      %1521 = vmatprep.mubr.f32.mxu0 0.0
      %1522 = vmatmul.mubr.f32.gmra.mrb[0].mxu0 %v647
      %v1523 = vpop.f32.mrb[0].mxu0
      %v1524 = vadd.f32 0.0, %v1523
      %v1525 = vpop.f32.mrb[0].mxu0
      %1526 = vmatprep.mubr.f32.mxu0 0.0
      %1527 = vmatmul.mubr.f32.gmra.mrb[0].mxu0 %v652
      %v1528 = vpop.f32.mrb[0].mxu0
      %v1529 = vadd.f32 0.0, %v1528
      %v1530 = vpop.f32.mrb[0].mxu0
      %1531 = vdwg.mxu0
      %s1532 = sld [smem:[#allocation2]]
      %v1533 = vstv %s1532
      %v1534 = vmul.f32 %v1533, %v1524
      %v1535 = vmul.f32 %v1533, %v1529
      %v1536 = vadd.f32 %v1534, %v557
      %v1537 = vadd.f32 %v1535, %v558
      %1538 = vst [vmem:[%s556] sm:$0xff] %v1536
      %1539 = vst [vmem:[%s556 + $0x8] sm:$0xff] %v1537
      %p1540 = scmp.lt.s32.totalorder %s23, 1
      %s1541 = scalar_select %p1540, %s23, 1
      %s1542 = smul.addr %s1541, 2
      %s1543 = smul.addr %s1542, 8
      %s1544 = scalar_lea.vmem %s11, %s1543
      // Predicated region
      $region65: #{criss_cross_attention_1.1} parent=63 // pred_check
        %p1545 = pneg %p323
      $region66: #{criss_cross_attention_1.1} parent=63 // pred_check_branch
        %1547 = sbr.rel (%p1545) target = $region68
      $region67: #{criss_cross_attention_1.1} parent=63 // pred_region
        _
      $region68: #{criss_cross_attention_1.1} parent=63 // pred_fallthru
        _
    $region64: #{criss_cross_attention_1.1} parent=5 // pred_fallthru
      _
    %p1548 = scmp.le.s32.totalorder 2, %s18
    // Predicated region
    $region69: #{criss_cross_attention_1.1} parent=5 // pred_check
      %p1549 = pneg %p1548
    $region70: #{criss_cross_attention_1.1} parent=5 // pred_check_branch
      %1551 = sbr.rel (%p1549) target = $region72
    $region71: #{criss_cross_attention_1.1} parent=5 // pred_region
      %s1552 = ssub.s32 %s18, 2
      // Predicated region
      $region73: #{criss_cross_attention_1.1} parent=71 // pred_check
        %p1553 = pneg %p329
      $region74: #{criss_cross_attention_1.1} parent=71 // pred_check_branch
        %1555 = sbr.rel (%p1553) target = $region76
      $region75: #{criss_cross_attention_1.1} parent=71 // pred_region
        %p1556 = scmp.lt.s32.totalorder %s24, 1
        %s1557 = scalar_select %p1556, %s24, 1
        %s1558 = smul.addr %s1557, 2
        %s1559 = smul.addr %s1558, 8
        %s1560 = scalar_lea.vmem %s11, %s1559
      $region76: #{criss_cross_attention_1.1} parent=71 // pred_fallthru
        _
    $region72: #{criss_cross_attention_1.1} parent=5 // pred_fallthru
      _
  $region6: #{criss_cross_attention_1.1} parent=0 // loop_footer
    %s22 = sadd.s32 1, %s18
  $region7: #{criss_cross_attention_1.1} parent=0 // loop_footer_branch
    %17 = sbr.rel target = $region3
  $region8: #{criss_cross_attention_1.1} parent=0 // loop_exit
    _

</llo_original>
